<compile_context>
chip_gen: v7x
topology: tpu7x:2x2x1
jax: 0.10.0
libtpu: 0.0.40
codegen_flags: <defaults>
</compile_context>

<pallas_src>
import functools

import jax
import jax.numpy as jnp
import numpy as np
from jax.experimental import pallas as pl
from jax.experimental.pallas import tpu as pltpu


def _sub1_matvec_kernel(x_ref, packed_ref, minmax_ref, y_ref,
                        acc_min_ref, acc_max_ref, *, tile_k):
    # x_ref:       (Bp, K)             bf16 activations, fully VMEM-resident,
    #                                  K columns host-permuted per K tile.
    # packed_ref:  (tile_k//4, tile_h) uint8, 4 ternary codes per byte (2 bits each)
    # minmax_ref:  (2, tile_h)         bf16, row 0 = row-min, row 1 = row-max
    # y_ref:       (Bp, tile_h)        bf16 output
    # acc_*_ref:   (Bp, tile_h)        f32 accumulators (resident across the K axis)
    k_step = pl.program_id(1)
    tile_kq = tile_k // 4

    @pl.when(k_step == 0)
    def _init():
        acc_min_ref[...] = jnp.zeros_like(acc_min_ref)
        acc_max_ref[...] = jnp.zeros_like(acc_max_ref)

    # uint8 -> int32 zero-extension; footprint equals the *unpacked* int8 codes.
    p = packed_ref[...].astype(jnp.int32)

    # 4 bit-planes, each a pair of accumulating 0/1-mask matmuls.  Only pure bit
    # ops on the int32 plane plus a single int->bf16 convert per mask (no bf16
    # selects, no broadcast materialization of min/max).
    for j in range(4):
        start = pl.multiple_of(k_step * tile_k + j * tile_kq, tile_kq)
        xj = x_ref[:, pl.ds(start, tile_kq)]                      # (Bp, tile_kq)
        m_min = ((p >> (2 * j)) & 1).astype(jnp.bfloat16)         # code == 1
        m_max = ((p >> (2 * j + 1)) & 1).astype(jnp.bfloat16)     # code == 2
        acc_min_ref[...] += jnp.dot(xj, m_min, preferred_element_type=jnp.float32)
        acc_max_ref[...] += jnp.dot(xj, m_max, preferred_element_type=jnp.float32)

    @pl.when(k_step == pl.num_programs(1) - 1)
    def _finalize():
        # Apply the per-row min/max scales once, in f32, on the tiny output tile.
        wmin = minmax_ref[0:1, :].astype(jnp.float32)             # (1, tile_h)
        wmax = minmax_ref[1:2, :].astype(jnp.float32)
        y_ref[...] = (acc_min_ref[...] * wmin
                      + acc_max_ref[...] * wmax).astype(jnp.bfloat16)


def sub1_prepare(w_tern, ter_minmax):
    """One-time weight prep (Pallas analog of sub1_cuda.sub1pack).

    w_tern:     (H, K) int ternary codes in {0,1,2}
    ter_minmax: (2*H,) bf16 interleaved [min0, max0, min1, max1, ...]
    returns packed_codes (K//4, H) uint8, minmax (2, H) bf16.
    """
    H, K = w_tern.shape
    assert K % 4 == 0
    c = jnp.asarray(w_tern).astype(jnp.int32)
    # Defensive: the bit-mask decompress would decode code 3 as min+max; the
    # original module only produces {0,1,2}, but force any stray 3 to 0.
    c = jnp.where(c == 3, 0, c)
    c = c.T.reshape(K // 4, 4, H)
    packed = (c[:, 0] | (c[:, 1] << 2) | (c[:, 2] << 4) | (c[:, 3] << 6)).astype(jnp.uint8)
    minmax = jnp.asarray(ter_minmax).astype(jnp.bfloat16).reshape(H, 2).T  # (2, H)
    return packed, minmax


def _vmem_capacity_bytes():
    try:
        info = pltpu.get_tpu_info()
        return int(getattr(info, "vmem_capacity_bytes", 64 * 1024 * 1024))
    except Exception:
        return 64 * 1024 * 1024


def _pick_tile(dim, candidates, prefer_multiple_tiles=False):
    best = None
    for c in candidates:
        if dim % c == 0:
            if not prefer_multiple_tiles or dim // c >= 2:
                return c
            if best is None:
                best = c
    return best if best is not None else dim


def sub1_linear(x, packed_codes, minmax, *, tile_h=None, tile_k=None):
    """y = x @ W^T with W decompressed on-chip from 2-bit packed ternary codes."""
    B, K = x.shape
    Kq, H = packed_codes.shape
    assert 4 * Kq == K, "packed codes must be shaped (K//4, H)"
    assert packed_codes.dtype == jnp.uint8
    assert minmax.shape == (2, H)

    vmem_cap = _vmem_capacity_bytes()
    # Leave headroom below physical VMEM: ~32 MiB on v7x (64 MiB/TC), 64 MiB on
    # v5e/v6e (128 MiB).
    vmem_limit = int(min(64 * 1024 * 1024, max(16 * 1024 * 1024, vmem_cap // 2)))

    # Tile defaults: lane-dense multiples of 128.  tile_h prefers >= 2 tiles so the
    # "parallel" axis can shard across both v7x TensorCores.  Larger K-tile
    # candidates only on 128 MiB-VMEM parts (v5e/v6e).
    if tile_h is None:
        tile_h = _pick_tile(H, (512, 256, 128), prefer_multiple_tiles=True)
    if tile_k is None:
        k_cands = (4096, 2048, 1024, 512, 256, 128) if vmem_cap >= 96 * 1024 * 1024 \
            else (2048, 1024, 512, 256, 128)
        tile_k = _pick_tile(K, k_cands)
    assert H % tile_h == 0 and K % tile_k == 0 and tile_k % 4 == 0
    tile_kq = tile_k // 4
    n_h, n_k = H // tile_h, K // tile_k

    # Pad batch to a multiple of 16 so bf16 loads and the output store use full
    # packed vregs; pad rows are zero and get sliced off below.
    Bp = ((B + 15) // 16) * 16
    if Bp != B:
        x = jnp.pad(x, ((0, Bp - B), (0, 0)))

    # Host-side column permutation of x so each bit-plane's x columns are
    # contiguous within a K tile ((j, kq) order per tile).
    x_perm = x.reshape(Bp, n_k, tile_kq, 4).transpose(0, 1, 3, 2).reshape(Bp, K)

    cost = pl.CostEstimate(
        flops=4 * Bp * H * K,            # two 0/1-mask matmuls
        transcendentals=0,
        # packed codes (H*K/4 bytes) + x read once (resident) + min/max + output
        bytes_accessed=int(H * K // 4 + Bp * K * 2 + 2 * H * 2 + Bp * H * 2),
    )

    kernel = functools.partial(_sub1_matvec_kernel, tile_k=tile_k)

    y = pl.pallas_call(
        kernel,
        out_shape=jax.ShapeDtypeStruct((Bp, H), jnp.bfloat16),
        grid_spec=pltpu.PrefetchScalarGridSpec(
            num_scalar_prefetch=0,
            grid=(n_h, n_k),
            in_specs=[
                # x: constant block index -> DMA'd once, stays VMEM-resident.
                pl.BlockSpec((Bp, K), lambda h, k: (0, 0)),
                pl.BlockSpec((tile_kq, tile_h), lambda h, k: (k, h)),  # packed codes
                pl.BlockSpec((2, tile_h), lambda h, k: (0, h)),        # [min; max]
            ],
            out_specs=pl.BlockSpec((Bp, tile_h), lambda h, k: (0, h)),
            scratch_shapes=[
                pltpu.VMEM((Bp, tile_h), jnp.float32),   # acc for min-mask matmuls
                pltpu.VMEM((Bp, tile_h), jnp.float32),   # acc for max-mask matmuls
            ],
        ),
        compiler_params=pltpu.CompilerParams(
            dimension_semantics=("parallel", "arbitrary"),
            vmem_limit_bytes=vmem_limit,
        ),
        cost_estimate=cost,
    )(x_perm, packed_codes, minmax)

    return y[:B]


if __name__ == "__main__":
    # Small deterministic problem: batch=8, in-features K=512, out rows H=512.
    B, K, H = 8, 512, 512
    key = jax.random.PRNGKey(0)
    k_codes, k_min, k_max, k_x = jax.random.split(key, 4)

    # Deterministic "parameters" (equivalent of Sub1Linear.make on a ternary w):
    w_tern = jax.random.randint(k_codes, (H, K), 0, 3).astype(jnp.int8)
    wmin = (-jax.random.uniform(k_min, (H,), jnp.float32, 0.5, 1.5)).astype(jnp.bfloat16)
    wmax = (jax.random.uniform(k_max, (H,), jnp.float32, 0.5, 1.5)).astype(jnp.bfloat16)
    # Interleaved [min0, max0, min1, max1, ...] exactly like the torch buffer.
    ter_minmax = jnp.stack([wmin, wmax], axis=1).reshape(-1)

    x = jax.random.normal(k_x, (B, K), jnp.float32).astype(jnp.bfloat16)

    packed_codes, minmax = sub1_prepare(w_tern, ter_minmax)
    y = sub1_linear(x, packed_codes, minmax)
    y = jax.block_until_ready(y)

    # Pure-numpy reference of the decompressed matvec.
    codes_np = np.asarray(w_tern)
    w_full = np.where(codes_np == 1, np.asarray(wmin, np.float32)[:, None],
                      np.where(codes_np == 2, np.asarray(wmax, np.float32)[:, None],
                               0.0))
    y_ref = np.asarray(x, np.float32) @ w_full.T

    assert y.shape == (B, H) and y.dtype == jnp.bfloat16
    np.testing.assert_allclose(np.asarray(y, np.float32), y_ref, rtol=5e-2, atol=5e-1)
    print("KERNEL_OK")
</pallas_src>

<mosaic_0001>
module attributes {stable_mosaic.version = 11 : i64} {
  func.func @_sub1_matvec_kernel(%arg0: i32, %arg1: i32, %arg2: memref<16x512xbf16, #tpu.memory_space<vmem>>, %arg3: memref<128x256xi8, #tpu.memory_space<vmem>>, %arg4: memref<2x256xbf16, #tpu.memory_space<vmem>>, %arg5: memref<16x256xbf16, #tpu.memory_space<vmem>>, %arg6: memref<16x256xf32, #tpu.memory_space<vmem>>, %arg7: memref<16x256xf32, #tpu.memory_space<vmem>>) attributes {dimension_semantics = [#tpu.dimension_semantics<parallel>, #tpu.dimension_semantics<arbitrary>], iteration_bounds = array<i64: 2, 1>, scalar_prefetch = 0 : i64, scratch_operands = 2 : i64, tpu.core_type = #tpu.core_type<tc>, window_params = [{pipeline_mode = #tpu.pipeline_mode<synchronous>, transform_indices = @transform_0, window_bounds = array<i64: 16, 512>}, {transform_indices = @transform_1, window_bounds = array<i64: 128, 256>}, {transform_indices = @transform_2, window_bounds = array<i64: 2, 256>}, {transform_indices = @transform_3, window_bounds = array<i64: 16, 256>}]} {
    %c0_i32 = arith.constant 0 : i32
    %0 = arith.cmpi eq, %arg1, %c0_i32 : i32
    %1 = arith.extui %0 : i1 to i32
    %c0_i32_0 = arith.constant 0 : i32
    %2 = arith.cmpi ne, %1, %c0_i32_0 : i32
    scf.if %2 {
      %cst_60 = arith.constant 0.000000e+00 : f32
      %100 = vector.broadcast %cst_60 : f32 to vector<16x256xf32>
      %c0_61 = arith.constant 0 : index
      %c0_62 = arith.constant 0 : index
      %101 = vector.load %arg6[%c0_61, %c0_62] : memref<16x256xf32, #tpu.memory_space<vmem>>, vector<16x256xf32>
      tpu.vector_store %arg6[%c0_61, %c0_62], %100 {strides = array<i32>} : memref<16x256xf32, #tpu.memory_space<vmem>>, vector<16x256xf32>,
      %cst_63 = arith.constant 0.000000e+00 : f32
      %102 = vector.broadcast %cst_63 : f32 to vector<16x256xf32>
      %c0_64 = arith.constant 0 : index
      %c0_65 = arith.constant 0 : index
      %103 = vector.load %arg7[%c0_64, %c0_65] : memref<16x256xf32, #tpu.memory_space<vmem>>, vector<16x256xf32>
      tpu.vector_store %arg7[%c0_64, %c0_65], %102 {strides = array<i32>} : memref<16x256xf32, #tpu.memory_space<vmem>>, vector<16x256xf32>,
    } else {
    }
    %c0 = arith.constant 0 : index
    %c0_1 = arith.constant 0 : index
    %3 = vector.load %arg3[%c0, %c0_1] : memref<128x256xi8, #tpu.memory_space<vmem>>, vector<128x256xi8>
    %4 = arith.extui %3 : vector<128x256xi8> to vector<128x256xi32>
    %c512_i32 = arith.constant 512 : i32
    %5 = arith.muli %arg1, %c512_i32 : i32
    %c0_i32_2 = arith.constant 0 : i32
    %6 = arith.addi %5, %c0_i32_2 : i32
    %7 = tpu.assume_multiple %6, 128 : i32
    %c0_3 = arith.constant 0 : index
    %8 = arith.index_cast %7 : i32 to index
    %9 = vector.load %arg2[%c0_3, %8] : memref<16x512xbf16, #tpu.memory_space<vmem>>, vector<16x128xbf16>
    %c0_i32_4 = arith.constant 0 : i32
    %10 = vector.broadcast %c0_i32_4 : i32 to vector<128x256xi32>
    %11 = arith.shrsi %4, %10 : vector<128x256xi32>
    %c1_i32 = arith.constant 1 : i32
    %12 = vector.broadcast %c1_i32 : i32 to vector<128x256xi32>
    %13 = arith.andi %11, %12 : vector<128x256xi32>
    %14 = arith.sitofp %13 : vector<128x256xi32> to vector<128x256xbf16>
    %c1_i32_5 = arith.constant 1 : i32
    %15 = vector.broadcast %c1_i32_5 : i32 to vector<128x256xi32>
    %16 = arith.shrsi %4, %15 : vector<128x256xi32>
    %c1_i32_6 = arith.constant 1 : i32
    %17 = vector.broadcast %c1_i32_6 : i32 to vector<128x256xi32>
    %18 = arith.andi %16, %17 : vector<128x256xi32>
    %19 = arith.sitofp %18 : vector<128x256xi32> to vector<128x256xbf16>
    %c0_7 = arith.constant 0 : index
    %c0_8 = arith.constant 0 : index
    %20 = vector.load %arg6[%c0_7, %c0_8] : memref<16x256xf32, #tpu.memory_space<vmem>>, vector<16x256xf32>
    %cst = arith.constant dense<0.000000e+00> : vector<16x256xf32>
    %21 = tpu.matmul %9, %14, %cst {dimension_numbers = #tpu.dot_dimension_numbers<[1], [0], [0], [1], [0, 0, 1, 1], [], []>} : vector<16x128xbf16>, vector<128x256xbf16>, vector<16x256xf32> -> vector<16x256xf32>
    %22 = arith.addf %20, %21 : vector<16x256xf32>
    %c0_9 = arith.constant 0 : index
    %c0_10 = arith.constant 0 : index
    %23 = vector.load %arg6[%c0_9, %c0_10] : memref<16x256xf32, #tpu.memory_space<vmem>>, vector<16x256xf32>
    tpu.vector_store %arg6[%c0_9, %c0_10], %22 {strides = array<i32>} : memref<16x256xf32, #tpu.memory_space<vmem>>, vector<16x256xf32>,
    %c0_11 = arith.constant 0 : index
    %c0_12 = arith.constant 0 : index
    %24 = vector.load %arg7[%c0_11, %c0_12] : memref<16x256xf32, #tpu.memory_space<vmem>>, vector<16x256xf32>
    %cst_13 = arith.constant dense<0.000000e+00> : vector<16x256xf32>
    %25 = tpu.matmul %9, %19, %cst_13 {dimension_numbers = #tpu.dot_dimension_numbers<[1], [0], [0], [1], [0, 0, 1, 1], [], []>} : vector<16x128xbf16>, vector<128x256xbf16>, vector<16x256xf32> -> vector<16x256xf32>
    %26 = arith.addf %24, %25 : vector<16x256xf32>
    %c0_14 = arith.constant 0 : index
    %c0_15 = arith.constant 0 : index
    %27 = vector.load %arg7[%c0_14, %c0_15] : memref<16x256xf32, #tpu.memory_space<vmem>>, vector<16x256xf32>
    tpu.vector_store %arg7[%c0_14, %c0_15], %26 {strides = array<i32>} : memref<16x256xf32, #tpu.memory_space<vmem>>, vector<16x256xf32>,
    %c512_i32_16 = arith.constant 512 : i32
    %28 = arith.muli %arg1, %c512_i32_16 : i32
    %c128_i32 = arith.constant 128 : i32
    %29 = arith.addi %28, %c128_i32 : i32
    %30 = tpu.assume_multiple %29, 128 : i32
    %c0_17 = arith.constant 0 : index
    %31 = arith.index_cast %30 : i32 to index
    %32 = vector.load %arg2[%c0_17, %31] : memref<16x512xbf16, #tpu.memory_space<vmem>>, vector<16x128xbf16>
    %c2_i32 = arith.constant 2 : i32
    %33 = vector.broadcast %c2_i32 : i32 to vector<128x256xi32>
    %34 = arith.shrsi %4, %33 : vector<128x256xi32>
    %c1_i32_18 = arith.constant 1 : i32
    %35 = vector.broadcast %c1_i32_18 : i32 to vector<128x256xi32>
    %36 = arith.andi %34, %35 : vector<128x256xi32>
    %37 = arith.sitofp %36 : vector<128x256xi32> to vector<128x256xbf16>
    %c3_i32 = arith.constant 3 : i32
    %38 = vector.broadcast %c3_i32 : i32 to vector<128x256xi32>
    %39 = arith.shrsi %4, %38 : vector<128x256xi32>
    %c1_i32_19 = arith.constant 1 : i32
    %40 = vector.broadcast %c1_i32_19 : i32 to vector<128x256xi32>
    %41 = arith.andi %39, %40 : vector<128x256xi32>
    %42 = arith.sitofp %41 : vector<128x256xi32> to vector<128x256xbf16>
    %c0_20 = arith.constant 0 : index
    %c0_21 = arith.constant 0 : index
    %43 = vector.load %arg6[%c0_20, %c0_21] : memref<16x256xf32, #tpu.memory_space<vmem>>, vector<16x256xf32>
    %cst_22 = arith.constant dense<0.000000e+00> : vector<16x256xf32>
    %44 = tpu.matmul %32, %37, %cst_22 {dimension_numbers = #tpu.dot_dimension_numbers<[1], [0], [0], [1], [0, 0, 1, 1], [], []>} : vector<16x128xbf16>, vector<128x256xbf16>, vector<16x256xf32> -> vector<16x256xf32>
    %45 = arith.addf %43, %44 : vector<16x256xf32>
    %c0_23 = arith.constant 0 : index
    %c0_24 = arith.constant 0 : index
    %46 = vector.load %arg6[%c0_23, %c0_24] : memref<16x256xf32, #tpu.memory_space<vmem>>, vector<16x256xf32>
    tpu.vector_store %arg6[%c0_23, %c0_24], %45 {strides = array<i32>} : memref<16x256xf32, #tpu.memory_space<vmem>>, vector<16x256xf32>,
    %c0_25 = arith.constant 0 : index
    %c0_26 = arith.constant 0 : index
    %47 = vector.load %arg7[%c0_25, %c0_26] : memref<16x256xf32, #tpu.memory_space<vmem>>, vector<16x256xf32>
    %cst_27 = arith.constant dense<0.000000e+00> : vector<16x256xf32>
    %48 = tpu.matmul %32, %42, %cst_27 {dimension_numbers = #tpu.dot_dimension_numbers<[1], [0], [0], [1], [0, 0, 1, 1], [], []>} : vector<16x128xbf16>, vector<128x256xbf16>, vector<16x256xf32> -> vector<16x256xf32>
    %49 = arith.addf %47, %48 : vector<16x256xf32>
    %c0_28 = arith.constant 0 : index
    %c0_29 = arith.constant 0 : index
    %50 = vector.load %arg7[%c0_28, %c0_29] : memref<16x256xf32, #tpu.memory_space<vmem>>, vector<16x256xf32>
    tpu.vector_store %arg7[%c0_28, %c0_29], %49 {strides = array<i32>} : memref<16x256xf32, #tpu.memory_space<vmem>>, vector<16x256xf32>,
    %c512_i32_30 = arith.constant 512 : i32
    %51 = arith.muli %arg1, %c512_i32_30 : i32
    %c256_i32 = arith.constant 256 : i32
    %52 = arith.addi %51, %c256_i32 : i32
    %53 = tpu.assume_multiple %52, 128 : i32
    %c0_31 = arith.constant 0 : index
    %54 = arith.index_cast %53 : i32 to index
    %55 = vector.load %arg2[%c0_31, %54] : memref<16x512xbf16, #tpu.memory_space<vmem>>, vector<16x128xbf16>
    %c4_i32 = arith.constant 4 : i32
    %56 = vector.broadcast %c4_i32 : i32 to vector<128x256xi32>
    %57 = arith.shrsi %4, %56 : vector<128x256xi32>
    %c1_i32_32 = arith.constant 1 : i32
    %58 = vector.broadcast %c1_i32_32 : i32 to vector<128x256xi32>
    %59 = arith.andi %57, %58 : vector<128x256xi32>
    %60 = arith.sitofp %59 : vector<128x256xi32> to vector<128x256xbf16>
    %c5_i32 = arith.constant 5 : i32
    %61 = vector.broadcast %c5_i32 : i32 to vector<128x256xi32>
    %62 = arith.shrsi %4, %61 : vector<128x256xi32>
    %c1_i32_33 = arith.constant 1 : i32
    %63 = vector.broadcast %c1_i32_33 : i32 to vector<128x256xi32>
    %64 = arith.andi %62, %63 : vector<128x256xi32>
    %65 = arith.sitofp %64 : vector<128x256xi32> to vector<128x256xbf16>
    %c0_34 = arith.constant 0 : index
    %c0_35 = arith.constant 0 : index
    %66 = vector.load %arg6[%c0_34, %c0_35] : memref<16x256xf32, #tpu.memory_space<vmem>>, vector<16x256xf32>
    %cst_36 = arith.constant dense<0.000000e+00> : vector<16x256xf32>
    %67 = tpu.matmul %55, %60, %cst_36 {dimension_numbers = #tpu.dot_dimension_numbers<[1], [0], [0], [1], [0, 0, 1, 1], [], []>} : vector<16x128xbf16>, vector<128x256xbf16>, vector<16x256xf32> -> vector<16x256xf32>
    %68 = arith.addf %66, %67 : vector<16x256xf32>
    %c0_37 = arith.constant 0 : index
    %c0_38 = arith.constant 0 : index
    %69 = vector.load %arg6[%c0_37, %c0_38] : memref<16x256xf32, #tpu.memory_space<vmem>>, vector<16x256xf32>
    tpu.vector_store %arg6[%c0_37, %c0_38], %68 {strides = array<i32>} : memref<16x256xf32, #tpu.memory_space<vmem>>, vector<16x256xf32>,
    %c0_39 = arith.constant 0 : index
    %c0_40 = arith.constant 0 : index
    %70 = vector.load %arg7[%c0_39, %c0_40] : memref<16x256xf32, #tpu.memory_space<vmem>>, vector<16x256xf32>
    %cst_41 = arith.constant dense<0.000000e+00> : vector<16x256xf32>
    %71 = tpu.matmul %55, %65, %cst_41 {dimension_numbers = #tpu.dot_dimension_numbers<[1], [0], [0], [1], [0, 0, 1, 1], [], []>} : vector<16x128xbf16>, vector<128x256xbf16>, vector<16x256xf32> -> vector<16x256xf32>
    %72 = arith.addf %70, %71 : vector<16x256xf32>
    %c0_42 = arith.constant 0 : index
    %c0_43 = arith.constant 0 : index
    %73 = vector.load %arg7[%c0_42, %c0_43] : memref<16x256xf32, #tpu.memory_space<vmem>>, vector<16x256xf32>
    tpu.vector_store %arg7[%c0_42, %c0_43], %72 {strides = array<i32>} : memref<16x256xf32, #tpu.memory_space<vmem>>, vector<16x256xf32>,
    %c512_i32_44 = arith.constant 512 : i32
    %74 = arith.muli %arg1, %c512_i32_44 : i32
    %c384_i32 = arith.constant 384 : i32
    %75 = arith.addi %74, %c384_i32 : i32
    %76 = tpu.assume_multiple %75, 128 : i32
    %c0_45 = arith.constant 0 : index
    %77 = arith.index_cast %76 : i32 to index
    %78 = vector.load %arg2[%c0_45, %77] : memref<16x512xbf16, #tpu.memory_space<vmem>>, vector<16x128xbf16>
    %c6_i32 = arith.constant 6 : i32
    %79 = vector.broadcast %c6_i32 : i32 to vector<128x256xi32>
    %80 = arith.shrsi %4, %79 : vector<128x256xi32>
    %c1_i32_46 = arith.constant 1 : i32
    %81 = vector.broadcast %c1_i32_46 : i32 to vector<128x256xi32>
    %82 = arith.andi %80, %81 : vector<128x256xi32>
    %83 = arith.sitofp %82 : vector<128x256xi32> to vector<128x256xbf16>
    %c7_i32 = arith.constant 7 : i32
    %84 = vector.broadcast %c7_i32 : i32 to vector<128x256xi32>
    %85 = arith.shrsi %4, %84 : vector<128x256xi32>
    %c1_i32_47 = arith.constant 1 : i32
    %86 = vector.broadcast %c1_i32_47 : i32 to vector<128x256xi32>
    %87 = arith.andi %85, %86 : vector<128x256xi32>
    %88 = arith.sitofp %87 : vector<128x256xi32> to vector<128x256xbf16>
    %c0_48 = arith.constant 0 : index
    %c0_49 = arith.constant 0 : index
    %89 = vector.load %arg6[%c0_48, %c0_49] : memref<16x256xf32, #tpu.memory_space<vmem>>, vector<16x256xf32>
    %cst_50 = arith.constant dense<0.000000e+00> : vector<16x256xf32>
    %90 = tpu.matmul %78, %83, %cst_50 {dimension_numbers = #tpu.dot_dimension_numbers<[1], [0], [0], [1], [0, 0, 1, 1], [], []>} : vector<16x128xbf16>, vector<128x256xbf16>, vector<16x256xf32> -> vector<16x256xf32>
    %91 = arith.addf %89, %90 : vector<16x256xf32>
    %c0_51 = arith.constant 0 : index
    %c0_52 = arith.constant 0 : index
    %92 = vector.load %arg6[%c0_51, %c0_52] : memref<16x256xf32, #tpu.memory_space<vmem>>, vector<16x256xf32>
    tpu.vector_store %arg6[%c0_51, %c0_52], %91 {strides = array<i32>} : memref<16x256xf32, #tpu.memory_space<vmem>>, vector<16x256xf32>,
    %c0_53 = arith.constant 0 : index
    %c0_54 = arith.constant 0 : index
    %93 = vector.load %arg7[%c0_53, %c0_54] : memref<16x256xf32, #tpu.memory_space<vmem>>, vector<16x256xf32>
    %cst_55 = arith.constant dense<0.000000e+00> : vector<16x256xf32>
    %94 = tpu.matmul %78, %88, %cst_55 {dimension_numbers = #tpu.dot_dimension_numbers<[1], [0], [0], [1], [0, 0, 1, 1], [], []>} : vector<16x128xbf16>, vector<128x256xbf16>, vector<16x256xf32> -> vector<16x256xf32>
    %95 = arith.addf %93, %94 : vector<16x256xf32>
    %c0_56 = arith.constant 0 : index
    %c0_57 = arith.constant 0 : index
    %96 = vector.load %arg7[%c0_56, %c0_57] : memref<16x256xf32, #tpu.memory_space<vmem>>, vector<16x256xf32>
    tpu.vector_store %arg7[%c0_56, %c0_57], %95 {strides = array<i32>} : memref<16x256xf32, #tpu.memory_space<vmem>>, vector<16x256xf32>,
    %c0_i32_58 = arith.constant 0 : i32
    %97 = arith.cmpi eq, %arg1, %c0_i32_58 : i32
    %98 = arith.extui %97 : i1 to i32
    %c0_i32_59 = arith.constant 0 : i32
    %99 = arith.cmpi ne, %98, %c0_i32_59 : i32
    scf.if %99 {
      %c0_60 = arith.constant 0 : index
      %c0_61 = arith.constant 0 : index
      %100 = vector.load %arg4[%c0_60, %c0_61] : memref<2x256xbf16, #tpu.memory_space<vmem>>, vector<1x256xbf16>
      %101 = arith.extf %100 : vector<1x256xbf16> to vector<1x256xf32>
      %c1 = arith.constant 1 : index
      %c0_62 = arith.constant 0 : index
      %102 = vector.load %arg4[%c1, %c0_62] : memref<2x256xbf16, #tpu.memory_space<vmem>>, vector<1x256xbf16>
      %103 = arith.extf %102 : vector<1x256xbf16> to vector<1x256xf32>
      %c0_63 = arith.constant 0 : index
      %c0_64 = arith.constant 0 : index
      %104 = vector.load %arg6[%c0_63, %c0_64] : memref<16x256xf32, #tpu.memory_space<vmem>>, vector<16x256xf32>
      %105 = vector.broadcast %101 : vector<1x256xf32> to vector<16x256xf32>
      %106 = arith.mulf %104, %105 : vector<16x256xf32>
      %c0_65 = arith.constant 0 : index
      %c0_66 = arith.constant 0 : index
      %107 = vector.load %arg7[%c0_65, %c0_66] : memref<16x256xf32, #tpu.memory_space<vmem>>, vector<16x256xf32>
      %108 = vector.broadcast %103 : vector<1x256xf32> to vector<16x256xf32>
      %109 = arith.mulf %107, %108 : vector<16x256xf32>
      %110 = arith.addf %106, %109 : vector<16x256xf32>
      %111 = arith.truncf %110 : vector<16x256xf32> to vector<16x256xbf16>
      %c0_67 = arith.constant 0 : index
      %c0_68 = arith.constant 0 : index
      %112 = vector.load %arg5[%c0_67, %c0_68] : memref<16x256xbf16, #tpu.memory_space<vmem>>, vector<16x256xbf16>
      tpu.vector_store %arg5[%c0_67, %c0_68], %111 {strides = array<i32>} : memref<16x256xbf16, #tpu.memory_space<vmem>>, vector<16x256xbf16>,
    } else {
    }
    return
  }
  func.func @transform_0(%arg0: i32, %arg1: i32) -> (i32, i32) {
    %c0_i32 = arith.constant 0 : i32
    %c0_i32_0 = arith.constant 0 : i32
    %c0_i32_1 = arith.constant 0 : i32
    return %c0_i32, %c0_i32_0 : i32, i32
  }
  func.func @transform_1(%arg0: i32, %arg1: i32) -> (i32, i32) {
    %c0_i32 = arith.constant 0 : i32
    return %arg1, %arg0 : i32, i32
  }
  func.func @transform_2(%arg0: i32, %arg1: i32) -> (i32, i32) {
    %c0_i32 = arith.constant 0 : i32
    %c0_i32_0 = arith.constant 0 : i32
    return %c0_i32, %arg0 : i32, i32
  }
  func.func @transform_3(%arg0: i32, %arg1: i32) -> (i32, i32) {
    %c0_i32 = arith.constant 0 : i32
    %c0_i32_0 = arith.constant 0 : i32
    return %c0_i32, %arg0 : i32, i32
  }
}

</mosaic_0001>

<llo_original>
// kernel: tpu_custom_call.1
$region0: #{tpu_custom_call.1}
  #allocation0 [shape = 'u32[]', space=smem, size = 0x4, offset = 0x4, fixed_abs, tag = 'smem constant byte address 0x4 - core index']
  #allocation1 [shape = 'u32[144,128]{1,0:T(1,128)}', space=vmem, size = 0x12000, scoped, tag = 'internal scratch']
  #allocation2 [shape = 'f32[16,256]{1,0:T(8,128)}', space=vmem, size = 0x4000, scoped, tag = 'scratch operand']
  #allocation3 [shape = 'f32[16,256]{1,0:T(8,128)}', space=vmem, size = 0x4000, scoped, tag = 'scratch operand']
  %s0 = inlined_call_operand.hbm [shape: bf16[16,512], index: 0, kind: input, shape index: {}]
  %s1 = inlined_call_operand.hbm [shape: u8[128,512], index: 1, kind: input, shape index: {}]
  %s2 = inlined_call_operand.vmem [shape: bf16[2,512], index: 2, kind: input, shape index: {}]
  %s3 = inlined_call_operand.hbm [shape: bf16[16,512], index: 3, kind: output, shape index: {}]
  %s4 = sld [smem:[#allocation0]]
  $region61: #{tpu_custom_call.1} parent=0
    _
  %s6 = ssub.s32 1, %s4
  %s7 = scalar_select 0, %s6, %s4
  $region1: #{tpu_custom_call.1} parent=0
    #allocation4 [shape = 'u8[16384]{0}', space=vmem, size = 0x4000, scoped, tag = 'input window, operand 0, single buffered']
    #allocation5 [shape = 's32[2]{0}', space=sflag, size = 0x8, scoped, tag = 'scoped memory for tpu_custom_call.1']
    #allocation6 [shape = 's32[2]{0}', space=sflag, size = 0x8, scoped, tag = 'scoped memory for tpu_custom_call.1']
    #allocation7 [shape = 'u8[65536]{0}', space=vmem, size = 0x10000, scoped, tag = 'input window, operand 1']
    #allocation8 [shape = 's32[2]{0}', space=sflag, size = 0x8, scoped, tag = 'scoped memory for tpu_custom_call.1']
    #allocation9 [shape = 'u8[16384]{0}', space=vmem, size = 0x4000, scoped, tag = 'output window, operand 0']
    %8 = vsyncpa [#allocation5], 0
    %9 = vsyncpa [#allocation8], 0
    %s10 = scalar_lea.sflag [#allocation8], 1
    %11 = vsyncpa %s10, 0
    %12 = vsyncpa [#allocation6], 0
    %s13 = scalar_lea.sflag [#allocation6], 1
    %14 = vsyncpa %s13, 0
    loop: start=0, step=1, limit=4
    $region2: #{tpu_custom_call.1} parent=1 // loop_pre_header
      _
    $region3: #{tpu_custom_call.1} parent=1 // loop_header
      %s16 = sphi 0, %s20
      %p17 = scmp.ge.s32.totalorder %s16, 4
      %s23 = sphi 0, %s35
      %s24 = sphi 0, %s31
      %s25 = sphi 0, %s23
      %s26 = sphi 0, %s24
      %s27 = sphi 0, %s25
      %s28 = sphi 0, %s26
      %s36 = sphi 0, %s36
      %s38 = sphi 0, %s36
      %s39 = sphi 0, %s38
      %s53 = sphi 0, %s39
      %s61 = sphi 0, %s63
      %s64 = sphi 0, %s61
      %s65 = sphi 0, %s64
      %s81 = sphi 0, %s65
      %s87 = sphi 0, %s89
      %s90 = sphi 0, %s87
      %s91 = sphi 0, %s90
      %s107 = sphi 0, %s91
      %s113 = sphi 0, %s115
      %s116 = sphi 0, %s113
      %s117 = sphi 0, %s116
      %s133 = sphi 0, %s117
    $region4: #{tpu_custom_call.1} parent=1 // loop_header_branch
      %19 = sbr.rel (%p17) target = $region8
    $region5: #{tpu_custom_call.1} parent=1 // loop_body
      %s21 = ssub.s32 %s16, 1
      %s22 = ssub.s32 %s16, 2
      %s29 = sadd.s32 1, %s24
      %p30 = scmp.ge.s32.totalorder %s29, 1
      %s31 = scalar_select %p30, 0, %s29
      %s32 = sadd.s32 1, %s23
      %s33 = scalar_select %p30, %s32, %s23
      %p34 = scmp.ge.s32.totalorder %s33, 2
      %s35 = scalar_select %p34, 0, %s33
      %s37 = sadd.s32 %s36, 1
      %p40 = scmp.eq.s32.totalorder %s16, 1
      %p41 = scmp.ne.s32.totalorder %s36, %s38
      %p42 = scmp.eq.s32.totalorder %s16, 0
      %p43 = por %p41, %p42
      %p44 = scmp.ne.s32.totalorder %s36, %s38
      %p45 = scmp.eq.s32.totalorder %s21, 1
      %p46 = por %p44, %p45
      %p47 = scmp.ne.s32.totalorder %s38, %s39
      %p48 = scmp.eq.s32.totalorder %s21, 0
      %p49 = por %p47, %p48
      %p50 = scmp.ne.s32.totalorder %s38, %s39
      %p51 = scmp.eq.s32.totalorder %s22, 1
      %p52 = por %p50, %p51
      %p54 = scmp.ne.s32.totalorder %s39, %s53
      %p55 = scmp.eq.s32.totalorder %s22, 0
      %p56 = por %p54, %p55
      %s57 = ssub.s32 %s24, %s31
      %s58 = ssub.s32 %s23, %s35
      %s59 = sor.u32 %s57, %s58
      %p60 = scmp.eq.s32.totalorder %s59, 0
      %s62 = sadd.s32 %s61, 1
      %s63 = scalar_select %p60, %s61, %s62
      %p66 = pneg %p60
      %p67 = scmp.eq.s32.totalorder %s16, 1
      %p68 = por %p66, %p67
      %p69 = scmp.ne.s32.totalorder %s61, %s64
      %p70 = scmp.eq.s32.totalorder %s16, 0
      %p71 = por %p69, %p70
      %p72 = scmp.ne.s32.totalorder %s61, %s64
      %p73 = scmp.eq.s32.totalorder %s21, 1
      %p74 = por %p72, %p73
      %p75 = scmp.ne.s32.totalorder %s64, %s65
      %p76 = scmp.eq.s32.totalorder %s21, 0
      %p77 = por %p75, %p76
      %p78 = scmp.ne.s32.totalorder %s64, %s65
      %p79 = scmp.eq.s32.totalorder %s22, 1
      %p80 = por %p78, %p79
      %p82 = scmp.ne.s32.totalorder %s65, %s81
      %p83 = scmp.eq.s32.totalorder %s22, 0
      %p84 = por %p82, %p83
      %s85 = ssub.s32 %s23, %s35
      %p86 = scmp.eq.s32.totalorder %s85, 0
      %s88 = sadd.s32 %s87, 1
      %s89 = scalar_select %p86, %s87, %s88
      %p92 = pneg %p86
      %p93 = scmp.eq.s32.totalorder %s16, 1
      %p94 = por %p92, %p93
      %p95 = scmp.ne.s32.totalorder %s87, %s90
      %p96 = scmp.eq.s32.totalorder %s16, 0
      %p97 = por %p95, %p96
      %p98 = scmp.ne.s32.totalorder %s87, %s90
      %p99 = scmp.eq.s32.totalorder %s21, 1
      %p100 = por %p98, %p99
      %p101 = scmp.ne.s32.totalorder %s90, %s91
      %p102 = scmp.eq.s32.totalorder %s21, 0
      %p103 = por %p101, %p102
      %p104 = scmp.ne.s32.totalorder %s90, %s91
      %p105 = scmp.eq.s32.totalorder %s22, 1
      %p106 = por %p104, %p105
      %p108 = scmp.ne.s32.totalorder %s91, %s107
      %p109 = scmp.eq.s32.totalorder %s22, 0
      %p110 = por %p108, %p109
      %s111 = ssub.s32 %s23, %s35
      %p112 = scmp.eq.s32.totalorder %s111, 0
      %s114 = sadd.s32 %s113, 1
      %s115 = scalar_select %p112, %s113, %s114
      %p118 = pneg %p112
      %p119 = scmp.eq.s32.totalorder %s16, 1
      %p120 = por %p118, %p119
      %p121 = scmp.ne.s32.totalorder %s113, %s116
      %p122 = scmp.eq.s32.totalorder %s16, 0
      %p123 = por %p121, %p122
      %p124 = scmp.ne.s32.totalorder %s113, %s116
      %p125 = scmp.eq.s32.totalorder %s21, 1
      %p126 = por %p124, %p125
      %p127 = scmp.ne.s32.totalorder %s116, %s117
      %p128 = scmp.eq.s32.totalorder %s21, 0
      %p129 = por %p127, %p128
      %p130 = scmp.ne.s32.totalorder %s116, %s117
      %p131 = scmp.eq.s32.totalorder %s22, 1
      %p132 = por %p130, %p131
      %p134 = scmp.ne.s32.totalorder %s117, %s133
      %p135 = scmp.eq.s32.totalorder %s22, 0
      %p136 = por %p134, %p135
      %p137 = scmp.le.s32.totalorder 1, %s16
      %p138 = scmp.lt.s32.totalorder %s16, 3
      %p139 = pnand %p137, %p138
      %p140 = pneg %p139
      // Predicated region
      $region9: #{tpu_custom_call.1} parent=5 // pred_check
        _
      $region10: #{tpu_custom_call.1} parent=5 // pred_check_branch
        %142 = sbr.rel (%p139) target = $region12
      $region11: #{tpu_custom_call.1} parent=5 // pred_region
        %s143 = ssub.s32 %s16, 1
        // Predicated region
        $region13: #{tpu_custom_call.1} parent=11 // pred_check
          %p144 = pneg %p49
        $region14: #{tpu_custom_call.1} parent=11 // pred_check_branch
          %146 = sbr.rel (%p144) target = $region16
        $region15: #{tpu_custom_call.1} parent=11 // pred_region
          %s148 = ssub.s32 512, 512
          %149 = vsyncadd [#allocation5], %s148
          %s150 = sshll.u32 [#allocation4], 4
          %s151 = int_to_ptr.vmem [resolvable:$true] %s150
          %156 = dma.hbm_to_vmem [thread:$0]  %s0, 512, %s151, [#allocation5], 256, 256, 16
        $region16: #{tpu_custom_call.1} parent=11 // pred_fallthru
          _
      $region12: #{tpu_custom_call.1} parent=5 // pred_fallthru
        _
      %p157 = scmp.lt.s32.totalorder %s16, 2
      // Predicated region
      $region17: #{tpu_custom_call.1} parent=5 // pred_check
        %p158 = pneg %p157
      $region18: #{tpu_custom_call.1} parent=5 // pred_check_branch
        %160 = sbr.rel (%p158) target = $region20
      $region19: #{tpu_custom_call.1} parent=5 // pred_region
        // Predicated region
        $region21: #{tpu_custom_call.1} parent=19 // pred_check
          %p161 = pneg %p71
        $region22: #{tpu_custom_call.1} parent=19 // pred_check_branch
          %163 = sbr.rel (%p161) target = $region24
        $region23: #{tpu_custom_call.1} parent=19 // pred_region
          %s164 = sand.u32 %s61, 1
          %s165 = scalar_lea.sflag [#allocation8], %s164
          %s166 = sand.u32 %s61, 1
          %s167 = smul.addr %s166, 64
          %s168 = scalar_lea.vmem [#allocation7], %s167
          %s169 = smul.u32 4, %s24
          %s170 = smul.u32 2, %s23
          %s172 = ssub.s32 1024, 1024
          %173 = vsyncadd %s165, %s172
          %s174 = smul.addr %s169, 4
          %s175 = sadd.s32 %s170, %s174
          %s176 = smul.addr %s175, 128
          %s177 = scalar_lea.hbm %s1, %s176
          %s178 = sshll.u32 %s168, 4
          %s179 = int_to_ptr.vmem [resolvable:$true] %s178
          %184 = dma.hbm_to_vmem [thread:$0]  %s177, 1024, %s179, %s165, 512, 256, 16
        $region24: #{tpu_custom_call.1} parent=19 // pred_fallthru
          _
        // Predicated region
        $region25: #{tpu_custom_call.1} parent=19 // pred_check
          %p185 = pneg %p97
        $region26: #{tpu_custom_call.1} parent=19 // pred_check_branch
          %187 = sbr.rel (%p185) target = $region28
        $region27: #{tpu_custom_call.1} parent=19 // pred_region
          %s188 = smul.u32 2, %s23
          %p189 = scmp.lt.s32.totalorder %s188, 3
          %s190 = scalar_select %p189, %s188, 3
          %s191 = scalar_lea.vmem %s2, %s190
          %s192 = smul.u32 2, %s23
        $region28: #{tpu_custom_call.1} parent=19 // pred_fallthru
          _
      $region20: #{tpu_custom_call.1} parent=5 // pred_fallthru
        _
      %p193 = scmp.le.s32.totalorder 1, %s16
      %p194 = scmp.lt.s32.totalorder %s16, 3
      %p195 = pnand %p193, %p194
      %p196 = pneg %p195
      // Predicated region
      $region29: #{tpu_custom_call.1} parent=5 // pred_check
        _
      $region30: #{tpu_custom_call.1} parent=5 // pred_check_branch
        %198 = sbr.rel (%p195) target = $region32
      $region31: #{tpu_custom_call.1} parent=5 // pred_region
        %s199 = ssub.s32 %s16, 1
        // Predicated region
        $region33: #{tpu_custom_call.1} parent=31 // pred_check
          %p200 = pneg %p49
        $region34: #{tpu_custom_call.1} parent=31 // pred_check_branch
          %202 = sbr.rel (%p200) target = $region36
        $region35: #{tpu_custom_call.1} parent=31 // pred_region
          %203 = dma.done [#allocation5], 512
        $region36: #{tpu_custom_call.1} parent=31 // pred_fallthru
          _
        %s204 = sand.u32 %s64, 1
        %s205 = scalar_lea.sflag [#allocation8], %s204
        %s206 = sand.u32 %s64, 1
        %s207 = smul.addr %s206, 64
        %s208 = scalar_lea.vmem [#allocation7], %s207
        // Predicated region
        $region37: #{tpu_custom_call.1} parent=31 // pred_check
          %p209 = pneg %p77
        $region38: #{tpu_custom_call.1} parent=31 // pred_check_branch
          %211 = sbr.rel (%p209) target = $region40
        $region39: #{tpu_custom_call.1} parent=31 // pred_region
          %212 = dma.done %s205, 1024
        $region40: #{tpu_custom_call.1} parent=31 // pred_fallthru
          _
        %p213 = pneg %p49
        %p214 = pneg %p46
        %s215 = sand.u32 %s64, 1
        %s216 = scalar_lea.sflag [#allocation8], %s215
        %s217 = sand.u32 %s64, 1
        %s218 = smul.addr %s217, 64
        %s219 = scalar_lea.vmem [#allocation7], %s218
        %p220 = pneg %p77
        %p221 = pneg %p74
        %s222 = smul.u32 2, %s25
        %p223 = scmp.lt.s32.totalorder %s222, 3
        %s224 = scalar_select %p223, %s222, 3
        %s225 = scalar_lea.vmem %s2, %s224
        %p226 = pneg %p103
        %p227 = pneg %p100
        %p228 = pneg %p129
        %p229 = pneg %p126
        %s230 = sand.u32 %s116, 1
        %s231 = scalar_lea.sflag [#allocation6], %s230
        %s232 = sand.u32 %s116, 1
        %s233 = smul.addr %s232, 16
        %s234 = scalar_lea.vmem [#allocation9], %s233
        %s235 = smul.u32 4, %s26
        %s236 = smul.u32 2, %s25
        %s237 = smul.u32 2, %s25
        %p238 = scmp.lt.s32.totalorder %s237, 3
        %s239 = scalar_select %p238, %s237, 3
        %s240 = scalar_lea.vmem %s2, %s239
        %s241 = smul.u32 2, %s25
        %s242 = smul.u32 2, %s25
        %p244 = scmp.eq.s32.totalorder %s26, 0
        // Predicated region
        $region41: #{tpu_custom_call.1} parent=31 // pred_check
          %p245 = pneg %p244
        $region42: #{tpu_custom_call.1} parent=31 // pred_check_branch
          %247 = sbr.rel (%p245) target = $region44
        $region43: #{tpu_custom_call.1} parent=31 // pred_region
          %248 = vst [vmem:[#allocation2] sm:$0xff] 0.0
          %249 = vst [vmem:[#allocation2 + $0x8] sm:$0xff] 0.0
          %250 = vst [vmem:[#allocation2 + $0x10] sm:$0xff] 0.0
          %251 = vst [vmem:[#allocation2 + $0x18] sm:$0xff] 0.0
          %252 = vst [vmem:[#allocation3] sm:$0xff] 0.0
          %253 = vst [vmem:[#allocation3 + $0x8] sm:$0xff] 0.0
          %254 = vst [vmem:[#allocation3 + $0x10] sm:$0xff] 0.0
          %255 = vst [vmem:[#allocation3 + $0x18] sm:$0xff] 0.0
        $region44: #{tpu_custom_call.1} parent=31 // pred_fallthru
          _
        %v256 = vld [vmem:[%s208] sm:$0xff]
        %v257 = vld [vmem:[%s208 + $0x8] sm:$0xff]
        %v258 = vld [vmem:[%s208 + $0x10] sm:$0xff]
        %v259 = vld [vmem:[%s208 + $0x18] sm:$0xff]
        %v260 = vld [vmem:[%s208 + $0x20] sm:$0xff]
        %v261 = vld [vmem:[%s208 + $0x28] sm:$0xff]
        %v262 = vld [vmem:[%s208 + $0x30] sm:$0xff]
        %v263 = vld [vmem:[%s208 + $0x38] sm:$0xff]
        %v264 = vunpack.c.0.s8 %v256
        %v265 = vunpack.c.0.s8 %v257
        %v266 = vunpack.c.1.s8 %v256
        %v267 = vunpack.c.1.s8 %v257
        %v268 = vunpack.c.2.s8 %v256
        %v269 = vunpack.c.2.s8 %v257
        %v270 = vunpack.c.3.s8 %v256
        %v271 = vunpack.c.3.s8 %v257
        %v272 = vunpack.c.0.s8 %v258
        %v273 = vunpack.c.0.s8 %v259
        %v274 = vunpack.c.1.s8 %v258
        %v275 = vunpack.c.1.s8 %v259
        %v276 = vunpack.c.2.s8 %v258
        %v277 = vunpack.c.2.s8 %v259
        %v278 = vunpack.c.3.s8 %v258
        %v279 = vunpack.c.3.s8 %v259
        %v280 = vunpack.c.0.s8 %v260
        %v281 = vunpack.c.0.s8 %v261
        %v282 = vunpack.c.1.s8 %v260
        %v283 = vunpack.c.1.s8 %v261
        %v284 = vunpack.c.2.s8 %v260
        %v285 = vunpack.c.2.s8 %v261
        %v286 = vunpack.c.3.s8 %v260
        %v287 = vunpack.c.3.s8 %v261
        %v288 = vunpack.c.0.s8 %v262
        %v289 = vunpack.c.0.s8 %v263
        %v290 = vunpack.c.1.s8 %v262
        %v291 = vunpack.c.1.s8 %v263
        %v292 = vunpack.c.2.s8 %v262
        %v293 = vunpack.c.2.s8 %v263
        %v294 = vunpack.c.3.s8 %v262
        %v295 = vunpack.c.3.s8 %v263
        %v296 = vand.u32 %v264, 255
        %v297 = vand.u32 %v265, 255
        %v298 = vand.u32 %v266, 255
        %v299 = vand.u32 %v267, 255
        %v300 = vand.u32 %v268, 255
        %v301 = vand.u32 %v269, 255
        %v302 = vand.u32 %v270, 255
        %v303 = vand.u32 %v271, 255
        %v304 = vand.u32 %v272, 255
        %v305 = vand.u32 %v273, 255
        %v306 = vand.u32 %v274, 255
        %v307 = vand.u32 %v275, 255
        %v308 = vand.u32 %v276, 255
        %v309 = vand.u32 %v277, 255
        %v310 = vand.u32 %v278, 255
        %v311 = vand.u32 %v279, 255
        %v312 = vand.u32 %v280, 255
        %v313 = vand.u32 %v281, 255
        %v314 = vand.u32 %v282, 255
        %v315 = vand.u32 %v283, 255
        %v316 = vand.u32 %v284, 255
        %v317 = vand.u32 %v285, 255
        %v318 = vand.u32 %v286, 255
        %v319 = vand.u32 %v287, 255
        %v320 = vand.u32 %v288, 255
        %v321 = vand.u32 %v289, 255
        %v322 = vand.u32 %v290, 255
        %v323 = vand.u32 %v291, 255
        %v324 = vand.u32 %v292, 255
        %v325 = vand.u32 %v293, 255
        %v326 = vand.u32 %v294, 255
        %v327 = vand.u32 %v295, 255
        %s328 = smul.u32 %s26, 512
        %s329 = sshra.s32 %s328, 7
        %s330 = sand.u32 %s328, 127
        %s331 = smul.addr %s329, 4
        %s332 = scalar_lea.vmem [#allocation4], %s331
        %v333 = vld [vmem:[%s332] sm:$0xf]
        %v334 = vld [vmem:[%s332 + $0x10] sm:$0xf]
        %v335 = vand.u32 %v296, 1
        %v336 = vand.u32 %v297, 1
        %v337 = vand.u32 %v298, 1
        %v338 = vand.u32 %v299, 1
        %v339 = vand.u32 %v300, 1
        %v340 = vand.u32 %v301, 1
        %v341 = vand.u32 %v302, 1
        %v342 = vand.u32 %v303, 1
        %v343 = vand.u32 %v304, 1
        %v344 = vand.u32 %v305, 1
        %v345 = vand.u32 %v306, 1
        %v346 = vand.u32 %v307, 1
        %v347 = vand.u32 %v308, 1
        %v348 = vand.u32 %v309, 1
        %v349 = vand.u32 %v310, 1
        %v350 = vand.u32 %v311, 1
        %v351 = vand.u32 %v312, 1
        %v352 = vand.u32 %v313, 1
        %v353 = vand.u32 %v314, 1
        %v354 = vand.u32 %v315, 1
        %v355 = vand.u32 %v316, 1
        %v356 = vand.u32 %v317, 1
        %v357 = vand.u32 %v318, 1
        %v358 = vand.u32 %v319, 1
        %v359 = vand.u32 %v320, 1
        %v360 = vand.u32 %v321, 1
        %v361 = vand.u32 %v322, 1
        %v362 = vand.u32 %v323, 1
        %v363 = vand.u32 %v324, 1
        %v364 = vand.u32 %v325, 1
        %v365 = vand.u32 %v326, 1
        %v366 = vand.u32 %v327, 1
        %v367 = vcvt.s32.f32 %v335
        %v368 = vcvt.s32.f32 %v336
        %v369 = vcvt.s32.f32 %v337
        %v370 = vcvt.s32.f32 %v338
        %v371 = vcvt.s32.f32 %v339
        %v372 = vcvt.s32.f32 %v340
        %v373 = vcvt.s32.f32 %v341
        %v374 = vcvt.s32.f32 %v342
        %v375 = vcvt.s32.f32 %v343
        %v376 = vcvt.s32.f32 %v344
        %v377 = vcvt.s32.f32 %v345
        %v378 = vcvt.s32.f32 %v346
        %v379 = vcvt.s32.f32 %v347
        %v380 = vcvt.s32.f32 %v348
        %v381 = vcvt.s32.f32 %v349
        %v382 = vcvt.s32.f32 %v350
        %v383 = vcvt.s32.f32 %v351
        %v384 = vcvt.s32.f32 %v352
        %v385 = vcvt.s32.f32 %v353
        %v386 = vcvt.s32.f32 %v354
        %v387 = vcvt.s32.f32 %v355
        %v388 = vcvt.s32.f32 %v356
        %v389 = vcvt.s32.f32 %v357
        %v390 = vcvt.s32.f32 %v358
        %v391 = vcvt.s32.f32 %v359
        %v392 = vcvt.s32.f32 %v360
        %v393 = vcvt.s32.f32 %v361
        %v394 = vcvt.s32.f32 %v362
        %v395 = vcvt.s32.f32 %v363
        %v396 = vcvt.s32.f32 %v364
        %v397 = vcvt.s32.f32 %v365
        %v398 = vcvt.s32.f32 %v366
        %v399 = vpack.c.bf16 %v369, %v367
        %v400 = vpack.c.bf16 %v370, %v368
        %v401 = vpack.c.bf16 %v373, %v371
        %v402 = vpack.c.bf16 %v374, %v372
        %v403 = vpack.c.bf16 %v377, %v375
        %v404 = vpack.c.bf16 %v378, %v376
        %v405 = vpack.c.bf16 %v381, %v379
        %v406 = vpack.c.bf16 %v382, %v380
        %v407 = vpack.c.bf16 %v385, %v383
        %v408 = vpack.c.bf16 %v386, %v384
        %v409 = vpack.c.bf16 %v389, %v387
        %v410 = vpack.c.bf16 %v390, %v388
        %v411 = vpack.c.bf16 %v393, %v391
        %v412 = vpack.c.bf16 %v394, %v392
        %v413 = vpack.c.bf16 %v397, %v395
        %v414 = vpack.c.bf16 %v398, %v396
        %v415 = vshra.s32 %v296, 1
        %v416 = vshra.s32 %v297, 1
        %v417 = vshra.s32 %v298, 1
        %v418 = vshra.s32 %v299, 1
        %v419 = vshra.s32 %v300, 1
        %v420 = vshra.s32 %v301, 1
        %v421 = vshra.s32 %v302, 1
        %v422 = vshra.s32 %v303, 1
        %v423 = vshra.s32 %v304, 1
        %v424 = vshra.s32 %v305, 1
        %v425 = vshra.s32 %v306, 1
        %v426 = vshra.s32 %v307, 1
        %v427 = vshra.s32 %v308, 1
        %v428 = vshra.s32 %v309, 1
        %v429 = vshra.s32 %v310, 1
        %v430 = vshra.s32 %v311, 1
        %v431 = vshra.s32 %v312, 1
        %v432 = vshra.s32 %v313, 1
        %v433 = vshra.s32 %v314, 1
        %v434 = vshra.s32 %v315, 1
        %v435 = vshra.s32 %v316, 1
        %v436 = vshra.s32 %v317, 1
        %v437 = vshra.s32 %v318, 1
        %v438 = vshra.s32 %v319, 1
        %v439 = vshra.s32 %v320, 1
        %v440 = vshra.s32 %v321, 1
        %v441 = vshra.s32 %v322, 1
        %v442 = vshra.s32 %v323, 1
        %v443 = vshra.s32 %v324, 1
        %v444 = vshra.s32 %v325, 1
        %v445 = vshra.s32 %v326, 1
        %v446 = vshra.s32 %v327, 1
        %v447 = vand.u32 %v415, 1
        %v448 = vand.u32 %v416, 1
        %v449 = vand.u32 %v417, 1
        %v450 = vand.u32 %v418, 1
        %v451 = vand.u32 %v419, 1
        %v452 = vand.u32 %v420, 1
        %v453 = vand.u32 %v421, 1
        %v454 = vand.u32 %v422, 1
        %v455 = vand.u32 %v423, 1
        %v456 = vand.u32 %v424, 1
        %v457 = vand.u32 %v425, 1
        %v458 = vand.u32 %v426, 1
        %v459 = vand.u32 %v427, 1
        %v460 = vand.u32 %v428, 1
        %v461 = vand.u32 %v429, 1
        %v462 = vand.u32 %v430, 1
        %v463 = vand.u32 %v431, 1
        %v464 = vand.u32 %v432, 1
        %v465 = vand.u32 %v433, 1
        %v466 = vand.u32 %v434, 1
        %v467 = vand.u32 %v435, 1
        %v468 = vand.u32 %v436, 1
        %v469 = vand.u32 %v437, 1
        %v470 = vand.u32 %v438, 1
        %v471 = vand.u32 %v439, 1
        %v472 = vand.u32 %v440, 1
        %v473 = vand.u32 %v441, 1
        %v474 = vand.u32 %v442, 1
        %v475 = vand.u32 %v443, 1
        %v476 = vand.u32 %v444, 1
        %v477 = vand.u32 %v445, 1
        %v478 = vand.u32 %v446, 1
        %v479 = vcvt.s32.f32 %v447
        %v480 = vcvt.s32.f32 %v448
        %v481 = vcvt.s32.f32 %v449
        %v482 = vcvt.s32.f32 %v450
        %v483 = vcvt.s32.f32 %v451
        %v484 = vcvt.s32.f32 %v452
        %v485 = vcvt.s32.f32 %v453
        %v486 = vcvt.s32.f32 %v454
        %v487 = vcvt.s32.f32 %v455
        %v488 = vcvt.s32.f32 %v456
        %v489 = vcvt.s32.f32 %v457
        %v490 = vcvt.s32.f32 %v458
        %v491 = vcvt.s32.f32 %v459
        %v492 = vcvt.s32.f32 %v460
        %v493 = vcvt.s32.f32 %v461
        %v494 = vcvt.s32.f32 %v462
        %v495 = vcvt.s32.f32 %v463
        %v496 = vcvt.s32.f32 %v464
        %v497 = vcvt.s32.f32 %v465
        %v498 = vcvt.s32.f32 %v466
        %v499 = vcvt.s32.f32 %v467
        %v500 = vcvt.s32.f32 %v468
        %v501 = vcvt.s32.f32 %v469
        %v502 = vcvt.s32.f32 %v470
        %v503 = vcvt.s32.f32 %v471
        %v504 = vcvt.s32.f32 %v472
        %v505 = vcvt.s32.f32 %v473
        %v506 = vcvt.s32.f32 %v474
        %v507 = vcvt.s32.f32 %v475
        %v508 = vcvt.s32.f32 %v476
        %v509 = vcvt.s32.f32 %v477
        %v510 = vcvt.s32.f32 %v478
        %v511 = vpack.c.bf16 %v481, %v479
        %v512 = vpack.c.bf16 %v482, %v480
        %v513 = vpack.c.bf16 %v485, %v483
        %v514 = vpack.c.bf16 %v486, %v484
        %v515 = vpack.c.bf16 %v489, %v487
        %v516 = vpack.c.bf16 %v490, %v488
        %v517 = vpack.c.bf16 %v493, %v491
        %v518 = vpack.c.bf16 %v494, %v492
        %v519 = vpack.c.bf16 %v497, %v495
        %v520 = vpack.c.bf16 %v498, %v496
        %v521 = vpack.c.bf16 %v501, %v499
        %v522 = vpack.c.bf16 %v502, %v500
        %v523 = vpack.c.bf16 %v505, %v503
        %v524 = vpack.c.bf16 %v506, %v504
        %v525 = vpack.c.bf16 %v509, %v507
        %v526 = vpack.c.bf16 %v510, %v508
        %v527 = vld [vmem:[#allocation2] sm:$0xff]
        %v528 = vld [vmem:[#allocation2 + $0x8] sm:$0xff]
        %v529 = vld [vmem:[#allocation2 + $0x10] sm:$0xff]
        %v530 = vld [vmem:[#allocation2 + $0x18] sm:$0xff]
        %v533 = vunpack.c.l.b16 %v333
        %v534 = vunpack.c.l.b16 %v334
        %v535 = vpack.c.b16 %v534, %v533
        %537 = vmatprep.subr.bf16.mxu0 %v400
        %538 = vmatpush1.bf16.msra.mxu0 %v399
        %539 = vmatprep.subr.bf16.mxu0 %v402
        %540 = vmatpush1.bf16.msra.mxu0 %v401
        %541 = vmatprep.subr.bf16.mxu0 %v404
        %542 = vmatpush1.bf16.msra.mxu0 %v403
        %543 = vmatprep.subr.bf16.mxu0 %v406
        %544 = vmatpush1.bf16.msra.mxu0 %v405
        %545 = vmatprep.subr.bf16.mxu0 %v408
        %546 = vmatpush1.bf16.msra.mxu0 %v407
        %547 = vmatprep.subr.bf16.mxu0 %v410
        %548 = vmatpush1.bf16.msra.mxu0 %v409
        %549 = vmatprep.subr.bf16.mxu0 %v412
        %550 = vmatpush1.bf16.msra.mxu0 %v411
        %551 = vmatprep.subr.bf16.mxu0 %v414
        %552 = vmatpush1.bf16.msra.mxu0 %v413
        %553 = vmatprep.subr.bf16.mxu0 0
        %554 = vmatpush1.bf16.msra.mxu0 0
        %555 = vmatprep.subr.bf16.mxu0 0
        %556 = vmatpush1.bf16.msra.mxu0 0
        %557 = vmatprep.subr.bf16.mxu0 0
        %558 = vmatpush1.bf16.msra.mxu0 0
        %559 = vmatprep.subr.bf16.mxu0 0
        %560 = vmatpush1.bf16.msra.mxu0 0
        %561 = vmatprep.subr.bf16.mxu0 0
        %562 = vmatpush1.bf16.msra.mxu0 0
        %563 = vmatprep.subr.bf16.mxu0 0
        %564 = vmatpush1.bf16.msra.mxu0 0
        %565 = vmatprep.subr.bf16.mxu0 0
        %566 = vmatpush1.bf16.msra.mxu0 0
        %567 = vmatprep.subr.bf16.mxu0 0
        %568 = vmatpush1.bf16.msra.mxu0 0
        %569 = vmatprep.mubr.bf16.mxu0 0
        %570 = vmatmul.mubr.bf16.gmra.mrb[0].mxu0 %v535
        %v571 = vpop.f32.mrb[0].mxu0
        %v572 = vadd.f32 0.0, %v571
        %v573 = vpop.f32.mrb[0].mxu0
        %v574 = vadd.f32 0.0, %v573
        %v575 = vpop.f32.mrb[0].mxu0
        %v576 = vadd.f32 0.0, %v575
        %v577 = vpop.f32.mrb[0].mxu0
        %v578 = vadd.f32 0.0, %v577
        %579 = vdwg.mxu0
        %v580 = vadd.f32 %v527, %v572
        %v581 = vadd.f32 %v528, %v574
        %v582 = vadd.f32 %v529, %v576
        %v583 = vadd.f32 %v530, %v578
        %584 = vst [vmem:[#allocation2] sm:$0xff] %v580
        %585 = vst [vmem:[#allocation2 + $0x8] sm:$0xff] %v581
        %586 = vst [vmem:[#allocation2 + $0x10] sm:$0xff] %v582
        %587 = vst [vmem:[#allocation2 + $0x18] sm:$0xff] %v583
        %v588 = vld [vmem:[#allocation3] sm:$0xff]
        %v589 = vld [vmem:[#allocation3 + $0x8] sm:$0xff]
        %v590 = vld [vmem:[#allocation3 + $0x10] sm:$0xff]
        %v591 = vld [vmem:[#allocation3 + $0x18] sm:$0xff]
        %592 = vmatprep.subr.bf16.mxu0 %v512
        %593 = vmatpush1.bf16.msra.mxu0 %v511
        %594 = vmatprep.subr.bf16.mxu0 %v514
        %595 = vmatpush1.bf16.msra.mxu0 %v513
        %596 = vmatprep.subr.bf16.mxu0 %v516
        %597 = vmatpush1.bf16.msra.mxu0 %v515
        %598 = vmatprep.subr.bf16.mxu0 %v518
        %599 = vmatpush1.bf16.msra.mxu0 %v517
        %600 = vmatprep.subr.bf16.mxu0 %v520
        %601 = vmatpush1.bf16.msra.mxu0 %v519
        %602 = vmatprep.subr.bf16.mxu0 %v522
        %603 = vmatpush1.bf16.msra.mxu0 %v521
        %604 = vmatprep.subr.bf16.mxu0 %v524
        %605 = vmatpush1.bf16.msra.mxu0 %v523
        %606 = vmatprep.subr.bf16.mxu0 %v526
        %607 = vmatpush1.bf16.msra.mxu0 %v525
        %608 = vmatprep.subr.bf16.mxu0 0
        %609 = vmatpush1.bf16.msra.mxu0 0
        %610 = vmatprep.subr.bf16.mxu0 0
        %611 = vmatpush1.bf16.msra.mxu0 0
        %612 = vmatprep.subr.bf16.mxu0 0
        %613 = vmatpush1.bf16.msra.mxu0 0
        %614 = vmatprep.subr.bf16.mxu0 0
        %615 = vmatpush1.bf16.msra.mxu0 0
        %616 = vmatprep.subr.bf16.mxu0 0
        %617 = vmatpush1.bf16.msra.mxu0 0
        %618 = vmatprep.subr.bf16.mxu0 0
        %619 = vmatpush1.bf16.msra.mxu0 0
        %620 = vmatprep.subr.bf16.mxu0 0
        %621 = vmatpush1.bf16.msra.mxu0 0
        %622 = vmatprep.subr.bf16.mxu0 0
        %623 = vmatpush1.bf16.msra.mxu0 0
        %624 = vmatprep.mubr.bf16.mxu0 0
        %625 = vmatmul.mubr.bf16.gmra.mrb[0].mxu0 %v535
        %v626 = vpop.f32.mrb[0].mxu0
        %v627 = vadd.f32 0.0, %v626
        %v628 = vpop.f32.mrb[0].mxu0
        %v629 = vadd.f32 0.0, %v628
        %v630 = vpop.f32.mrb[0].mxu0
        %v631 = vadd.f32 0.0, %v630
        %v632 = vpop.f32.mrb[0].mxu0
        %v633 = vadd.f32 0.0, %v632
        %634 = vdwg.mxu0
        %v635 = vadd.f32 %v588, %v627
        %v636 = vadd.f32 %v589, %v629
        %v637 = vadd.f32 %v590, %v631
        %v638 = vadd.f32 %v591, %v633
        %639 = vst [vmem:[#allocation3] sm:$0xff] %v635
        %640 = vst [vmem:[#allocation3 + $0x8] sm:$0xff] %v636
        %641 = vst [vmem:[#allocation3 + $0x10] sm:$0xff] %v637
        %642 = vst [vmem:[#allocation3 + $0x18] sm:$0xff] %v638
        %s643 = sadd.s32 %s328, 128
        %s644 = sshra.s32 %s643, 7
        %s645 = sand.u32 %s643, 127
        %s646 = smul.addr %s644, 4
        %s647 = scalar_lea.vmem [#allocation4], %s646
        %v648 = vld [vmem:[%s647] sm:$0xf]
        %v649 = vld [vmem:[%s647 + $0x10] sm:$0xf]
        %v650 = vshra.s32 %v296, 2
        %v651 = vshra.s32 %v297, 2
        %v652 = vshra.s32 %v298, 2
        %v653 = vshra.s32 %v299, 2
        %v654 = vshra.s32 %v300, 2
        %v655 = vshra.s32 %v301, 2
        %v656 = vshra.s32 %v302, 2
        %v657 = vshra.s32 %v303, 2
        %v658 = vshra.s32 %v304, 2
        %v659 = vshra.s32 %v305, 2
        %v660 = vshra.s32 %v306, 2
        %v661 = vshra.s32 %v307, 2
        %v662 = vshra.s32 %v308, 2
        %v663 = vshra.s32 %v309, 2
        %v664 = vshra.s32 %v310, 2
        %v665 = vshra.s32 %v311, 2
        %v666 = vshra.s32 %v312, 2
        %v667 = vshra.s32 %v313, 2
        %v668 = vshra.s32 %v314, 2
        %v669 = vshra.s32 %v315, 2
        %v670 = vshra.s32 %v316, 2
        %v671 = vshra.s32 %v317, 2
        %v672 = vshra.s32 %v318, 2
        %v673 = vshra.s32 %v319, 2
        %v674 = vshra.s32 %v320, 2
        %v675 = vshra.s32 %v321, 2
        %v676 = vshra.s32 %v322, 2
        %v677 = vshra.s32 %v323, 2
        %v678 = vshra.s32 %v324, 2
        %v679 = vshra.s32 %v325, 2
        %v680 = vshra.s32 %v326, 2
        %v681 = vshra.s32 %v327, 2
        %v682 = vand.u32 %v650, 1
        %v683 = vand.u32 %v651, 1
        %v684 = vand.u32 %v652, 1
        %v685 = vand.u32 %v653, 1
        %v686 = vand.u32 %v654, 1
        %v687 = vand.u32 %v655, 1
        %v688 = vand.u32 %v656, 1
        %v689 = vand.u32 %v657, 1
        %v690 = vand.u32 %v658, 1
        %v691 = vand.u32 %v659, 1
        %v692 = vand.u32 %v660, 1
        %v693 = vand.u32 %v661, 1
        %v694 = vand.u32 %v662, 1
        %v695 = vand.u32 %v663, 1
        %v696 = vand.u32 %v664, 1
        %v697 = vand.u32 %v665, 1
        %v698 = vand.u32 %v666, 1
        %v699 = vand.u32 %v667, 1
        %v700 = vand.u32 %v668, 1
        %v701 = vand.u32 %v669, 1
        %v702 = vand.u32 %v670, 1
        %v703 = vand.u32 %v671, 1
        %v704 = vand.u32 %v672, 1
        %v705 = vand.u32 %v673, 1
        %v706 = vand.u32 %v674, 1
        %v707 = vand.u32 %v675, 1
        %v708 = vand.u32 %v676, 1
        %v709 = vand.u32 %v677, 1
        %v710 = vand.u32 %v678, 1
        %v711 = vand.u32 %v679, 1
        %v712 = vand.u32 %v680, 1
        %v713 = vand.u32 %v681, 1
        %v714 = vcvt.s32.f32 %v682
        %v715 = vcvt.s32.f32 %v683
        %v716 = vcvt.s32.f32 %v684
        %v717 = vcvt.s32.f32 %v685
        %v718 = vcvt.s32.f32 %v686
        %v719 = vcvt.s32.f32 %v687
        %v720 = vcvt.s32.f32 %v688
        %v721 = vcvt.s32.f32 %v689
        %v722 = vcvt.s32.f32 %v690
        %v723 = vcvt.s32.f32 %v691
        %v724 = vcvt.s32.f32 %v692
        %v725 = vcvt.s32.f32 %v693
        %v726 = vcvt.s32.f32 %v694
        %v727 = vcvt.s32.f32 %v695
        %v728 = vcvt.s32.f32 %v696
        %v729 = vcvt.s32.f32 %v697
        %v730 = vcvt.s32.f32 %v698
        %v731 = vcvt.s32.f32 %v699
        %v732 = vcvt.s32.f32 %v700
        %v733 = vcvt.s32.f32 %v701
        %v734 = vcvt.s32.f32 %v702
        %v735 = vcvt.s32.f32 %v703
        %v736 = vcvt.s32.f32 %v704
        %v737 = vcvt.s32.f32 %v705
        %v738 = vcvt.s32.f32 %v706
        %v739 = vcvt.s32.f32 %v707
        %v740 = vcvt.s32.f32 %v708
        %v741 = vcvt.s32.f32 %v709
        %v742 = vcvt.s32.f32 %v710
        %v743 = vcvt.s32.f32 %v711
        %v744 = vcvt.s32.f32 %v712
        %v745 = vcvt.s32.f32 %v713
        %v746 = vpack.c.bf16 %v716, %v714
        %v747 = vpack.c.bf16 %v717, %v715
        %v748 = vpack.c.bf16 %v720, %v718
        %v749 = vpack.c.bf16 %v721, %v719
        %v750 = vpack.c.bf16 %v724, %v722
        %v751 = vpack.c.bf16 %v725, %v723
        %v752 = vpack.c.bf16 %v728, %v726
        %v753 = vpack.c.bf16 %v729, %v727
        %v754 = vpack.c.bf16 %v732, %v730
        %v755 = vpack.c.bf16 %v733, %v731
        %v756 = vpack.c.bf16 %v736, %v734
        %v757 = vpack.c.bf16 %v737, %v735
        %v758 = vpack.c.bf16 %v740, %v738
        %v759 = vpack.c.bf16 %v741, %v739
        %v760 = vpack.c.bf16 %v744, %v742
        %v761 = vpack.c.bf16 %v745, %v743
        %v762 = vshra.s32 %v296, 3
        %v763 = vshra.s32 %v297, 3
        %v764 = vshra.s32 %v298, 3
        %v765 = vshra.s32 %v299, 3
        %v766 = vshra.s32 %v300, 3
        %v767 = vshra.s32 %v301, 3
        %v768 = vshra.s32 %v302, 3
        %v769 = vshra.s32 %v303, 3
        %v770 = vshra.s32 %v304, 3
        %v771 = vshra.s32 %v305, 3
        %v772 = vshra.s32 %v306, 3
        %v773 = vshra.s32 %v307, 3
        %v774 = vshra.s32 %v308, 3
        %v775 = vshra.s32 %v309, 3
        %v776 = vshra.s32 %v310, 3
        %v777 = vshra.s32 %v311, 3
        %v778 = vshra.s32 %v312, 3
        %v779 = vshra.s32 %v313, 3
        %v780 = vshra.s32 %v314, 3
        %v781 = vshra.s32 %v315, 3
        %v782 = vshra.s32 %v316, 3
        %v783 = vshra.s32 %v317, 3
        %v784 = vshra.s32 %v318, 3
        %v785 = vshra.s32 %v319, 3
        %v786 = vshra.s32 %v320, 3
        %v787 = vshra.s32 %v321, 3
        %v788 = vshra.s32 %v322, 3
        %v789 = vshra.s32 %v323, 3
        %v790 = vshra.s32 %v324, 3
        %v791 = vshra.s32 %v325, 3
        %v792 = vshra.s32 %v326, 3
        %v793 = vshra.s32 %v327, 3
        %v794 = vand.u32 %v762, 1
        %v795 = vand.u32 %v763, 1
        %v796 = vand.u32 %v764, 1
        %v797 = vand.u32 %v765, 1
        %v798 = vand.u32 %v766, 1
        %v799 = vand.u32 %v767, 1
        %v800 = vand.u32 %v768, 1
        %v801 = vand.u32 %v769, 1
        %v802 = vand.u32 %v770, 1
        %v803 = vand.u32 %v771, 1
        %v804 = vand.u32 %v772, 1
        %v805 = vand.u32 %v773, 1
        %v806 = vand.u32 %v774, 1
        %v807 = vand.u32 %v775, 1
        %v808 = vand.u32 %v776, 1
        %v809 = vand.u32 %v777, 1
        %v810 = vand.u32 %v778, 1
        %v811 = vand.u32 %v779, 1
        %v812 = vand.u32 %v780, 1
        %v813 = vand.u32 %v781, 1
        %v814 = vand.u32 %v782, 1
        %v815 = vand.u32 %v783, 1
        %v816 = vand.u32 %v784, 1
        %v817 = vand.u32 %v785, 1
        %v818 = vand.u32 %v786, 1
        %v819 = vand.u32 %v787, 1
        %v820 = vand.u32 %v788, 1
        %v821 = vand.u32 %v789, 1
        %v822 = vand.u32 %v790, 1
        %v823 = vand.u32 %v791, 1
        %v824 = vand.u32 %v792, 1
        %v825 = vand.u32 %v793, 1
        %v826 = vcvt.s32.f32 %v794
        %v827 = vcvt.s32.f32 %v795
        %v828 = vcvt.s32.f32 %v796
        %v829 = vcvt.s32.f32 %v797
        %v830 = vcvt.s32.f32 %v798
        %v831 = vcvt.s32.f32 %v799
        %v832 = vcvt.s32.f32 %v800
        %v833 = vcvt.s32.f32 %v801
        %v834 = vcvt.s32.f32 %v802
        %v835 = vcvt.s32.f32 %v803
        %v836 = vcvt.s32.f32 %v804
        %v837 = vcvt.s32.f32 %v805
        %v838 = vcvt.s32.f32 %v806
        %v839 = vcvt.s32.f32 %v807
        %v840 = vcvt.s32.f32 %v808
        %v841 = vcvt.s32.f32 %v809
        %v842 = vcvt.s32.f32 %v810
        %v843 = vcvt.s32.f32 %v811
        %v844 = vcvt.s32.f32 %v812
        %v845 = vcvt.s32.f32 %v813
        %v846 = vcvt.s32.f32 %v814
        %v847 = vcvt.s32.f32 %v815
        %v848 = vcvt.s32.f32 %v816
        %v849 = vcvt.s32.f32 %v817
        %v850 = vcvt.s32.f32 %v818
        %v851 = vcvt.s32.f32 %v819
        %v852 = vcvt.s32.f32 %v820
        %v853 = vcvt.s32.f32 %v821
        %v854 = vcvt.s32.f32 %v822
        %v855 = vcvt.s32.f32 %v823
        %v856 = vcvt.s32.f32 %v824
        %v857 = vcvt.s32.f32 %v825
        %v858 = vpack.c.bf16 %v828, %v826
        %v859 = vpack.c.bf16 %v829, %v827
        %v860 = vpack.c.bf16 %v832, %v830
        %v861 = vpack.c.bf16 %v833, %v831
        %v862 = vpack.c.bf16 %v836, %v834
        %v863 = vpack.c.bf16 %v837, %v835
        %v864 = vpack.c.bf16 %v840, %v838
        %v865 = vpack.c.bf16 %v841, %v839
        %v866 = vpack.c.bf16 %v844, %v842
        %v867 = vpack.c.bf16 %v845, %v843
        %v868 = vpack.c.bf16 %v848, %v846
        %v869 = vpack.c.bf16 %v849, %v847
        %v870 = vpack.c.bf16 %v852, %v850
        %v871 = vpack.c.bf16 %v853, %v851
        %v872 = vpack.c.bf16 %v856, %v854
        %v873 = vpack.c.bf16 %v857, %v855
        %v874 = vld [vmem:[#allocation2] sm:$0xff]
        %v875 = vld [vmem:[#allocation2 + $0x8] sm:$0xff]
        %v876 = vld [vmem:[#allocation2 + $0x10] sm:$0xff]
        %v877 = vld [vmem:[#allocation2 + $0x18] sm:$0xff]
        %v880 = vunpack.c.l.b16 %v648
        %v881 = vunpack.c.l.b16 %v649
        %v882 = vpack.c.b16 %v881, %v880
        %884 = vmatprep.subr.bf16.mxu0 %v747
        %885 = vmatpush1.bf16.msra.mxu0 %v746
        %886 = vmatprep.subr.bf16.mxu0 %v749
        %887 = vmatpush1.bf16.msra.mxu0 %v748
        %888 = vmatprep.subr.bf16.mxu0 %v751
        %889 = vmatpush1.bf16.msra.mxu0 %v750
        %890 = vmatprep.subr.bf16.mxu0 %v753
        %891 = vmatpush1.bf16.msra.mxu0 %v752
        %892 = vmatprep.subr.bf16.mxu0 %v755
        %893 = vmatpush1.bf16.msra.mxu0 %v754
        %894 = vmatprep.subr.bf16.mxu0 %v757
        %895 = vmatpush1.bf16.msra.mxu0 %v756
        %896 = vmatprep.subr.bf16.mxu0 %v759
        %897 = vmatpush1.bf16.msra.mxu0 %v758
        %898 = vmatprep.subr.bf16.mxu0 %v761
        %899 = vmatpush1.bf16.msra.mxu0 %v760
        %900 = vmatprep.subr.bf16.mxu0 0
        %901 = vmatpush1.bf16.msra.mxu0 0
        %902 = vmatprep.subr.bf16.mxu0 0
        %903 = vmatpush1.bf16.msra.mxu0 0
        %904 = vmatprep.subr.bf16.mxu0 0
        %905 = vmatpush1.bf16.msra.mxu0 0
        %906 = vmatprep.subr.bf16.mxu0 0
        %907 = vmatpush1.bf16.msra.mxu0 0
        %908 = vmatprep.subr.bf16.mxu0 0
        %909 = vmatpush1.bf16.msra.mxu0 0
        %910 = vmatprep.subr.bf16.mxu0 0
        %911 = vmatpush1.bf16.msra.mxu0 0
        %912 = vmatprep.subr.bf16.mxu0 0
        %913 = vmatpush1.bf16.msra.mxu0 0
        %914 = vmatprep.subr.bf16.mxu0 0
        %915 = vmatpush1.bf16.msra.mxu0 0
        %916 = vmatprep.mubr.bf16.mxu0 0
        %917 = vmatmul.mubr.bf16.gmra.mrb[0].mxu0 %v882
        %v918 = vpop.f32.mrb[0].mxu0
        %v919 = vadd.f32 0.0, %v918
        %v920 = vpop.f32.mrb[0].mxu0
        %v921 = vadd.f32 0.0, %v920
        %v922 = vpop.f32.mrb[0].mxu0
        %v923 = vadd.f32 0.0, %v922
        %v924 = vpop.f32.mrb[0].mxu0
        %v925 = vadd.f32 0.0, %v924
        %926 = vdwg.mxu0
        %v927 = vadd.f32 %v874, %v919
        %v928 = vadd.f32 %v875, %v921
        %v929 = vadd.f32 %v876, %v923
        %v930 = vadd.f32 %v877, %v925
        %931 = vst [vmem:[#allocation2] sm:$0xff] %v927
        %932 = vst [vmem:[#allocation2 + $0x8] sm:$0xff] %v928
        %933 = vst [vmem:[#allocation2 + $0x10] sm:$0xff] %v929
        %934 = vst [vmem:[#allocation2 + $0x18] sm:$0xff] %v930
        %v935 = vld [vmem:[#allocation3] sm:$0xff]
        %v936 = vld [vmem:[#allocation3 + $0x8] sm:$0xff]
        %v937 = vld [vmem:[#allocation3 + $0x10] sm:$0xff]
        %v938 = vld [vmem:[#allocation3 + $0x18] sm:$0xff]
        %939 = vmatprep.subr.bf16.mxu0 %v859
        %940 = vmatpush1.bf16.msra.mxu0 %v858
        %941 = vmatprep.subr.bf16.mxu0 %v861
        %942 = vmatpush1.bf16.msra.mxu0 %v860
        %943 = vmatprep.subr.bf16.mxu0 %v863
        %944 = vmatpush1.bf16.msra.mxu0 %v862
        %945 = vmatprep.subr.bf16.mxu0 %v865
        %946 = vmatpush1.bf16.msra.mxu0 %v864
        %947 = vmatprep.subr.bf16.mxu0 %v867
        %948 = vmatpush1.bf16.msra.mxu0 %v866
        %949 = vmatprep.subr.bf16.mxu0 %v869
        %950 = vmatpush1.bf16.msra.mxu0 %v868
        %951 = vmatprep.subr.bf16.mxu0 %v871
        %952 = vmatpush1.bf16.msra.mxu0 %v870
        %953 = vmatprep.subr.bf16.mxu0 %v873
        %954 = vmatpush1.bf16.msra.mxu0 %v872
        %955 = vmatprep.subr.bf16.mxu0 0
        %956 = vmatpush1.bf16.msra.mxu0 0
        %957 = vmatprep.subr.bf16.mxu0 0
        %958 = vmatpush1.bf16.msra.mxu0 0
        %959 = vmatprep.subr.bf16.mxu0 0
        %960 = vmatpush1.bf16.msra.mxu0 0
        %961 = vmatprep.subr.bf16.mxu0 0
        %962 = vmatpush1.bf16.msra.mxu0 0
        %963 = vmatprep.subr.bf16.mxu0 0
        %964 = vmatpush1.bf16.msra.mxu0 0
        %965 = vmatprep.subr.bf16.mxu0 0
        %966 = vmatpush1.bf16.msra.mxu0 0
        %967 = vmatprep.subr.bf16.mxu0 0
        %968 = vmatpush1.bf16.msra.mxu0 0
        %969 = vmatprep.subr.bf16.mxu0 0
        %970 = vmatpush1.bf16.msra.mxu0 0
        %971 = vmatprep.mubr.bf16.mxu0 0
        %972 = vmatmul.mubr.bf16.gmra.mrb[0].mxu0 %v882
        %v973 = vpop.f32.mrb[0].mxu0
        %v974 = vadd.f32 0.0, %v973
        %v975 = vpop.f32.mrb[0].mxu0
        %v976 = vadd.f32 0.0, %v975
        %v977 = vpop.f32.mrb[0].mxu0
        %v978 = vadd.f32 0.0, %v977
        %v979 = vpop.f32.mrb[0].mxu0
        %v980 = vadd.f32 0.0, %v979
        %981 = vdwg.mxu0
        %v982 = vadd.f32 %v935, %v974
        %v983 = vadd.f32 %v936, %v976
        %v984 = vadd.f32 %v937, %v978
        %v985 = vadd.f32 %v938, %v980
        %986 = vst [vmem:[#allocation3] sm:$0xff] %v982
        %987 = vst [vmem:[#allocation3 + $0x8] sm:$0xff] %v983
        %988 = vst [vmem:[#allocation3 + $0x10] sm:$0xff] %v984
        %989 = vst [vmem:[#allocation3 + $0x18] sm:$0xff] %v985
        %s990 = sadd.s32 %s328, 256
        %s991 = sshra.s32 %s990, 7
        %s992 = sand.u32 %s990, 127
        %s993 = smul.addr %s991, 4
        %s994 = scalar_lea.vmem [#allocation4], %s993
        %v995 = vld [vmem:[%s994] sm:$0xf]
        %v996 = vld [vmem:[%s994 + $0x10] sm:$0xf]
        %v997 = vshra.s32 %v296, 4
        %v998 = vshra.s32 %v297, 4
        %v999 = vshra.s32 %v298, 4
        %v1000 = vshra.s32 %v299, 4
        %v1001 = vshra.s32 %v300, 4
        %v1002 = vshra.s32 %v301, 4
        %v1003 = vshra.s32 %v302, 4
        %v1004 = vshra.s32 %v303, 4
        %v1005 = vshra.s32 %v304, 4
        %v1006 = vshra.s32 %v305, 4
        %v1007 = vshra.s32 %v306, 4
        %v1008 = vshra.s32 %v307, 4
        %v1009 = vshra.s32 %v308, 4
        %v1010 = vshra.s32 %v309, 4
        %v1011 = vshra.s32 %v310, 4
        %v1012 = vshra.s32 %v311, 4
        %v1013 = vshra.s32 %v312, 4
        %v1014 = vshra.s32 %v313, 4
        %v1015 = vshra.s32 %v314, 4
        %v1016 = vshra.s32 %v315, 4
        %v1017 = vshra.s32 %v316, 4
        %v1018 = vshra.s32 %v317, 4
        %v1019 = vshra.s32 %v318, 4
        %v1020 = vshra.s32 %v319, 4
        %v1021 = vshra.s32 %v320, 4
        %v1022 = vshra.s32 %v321, 4
        %v1023 = vshra.s32 %v322, 4
        %v1024 = vshra.s32 %v323, 4
        %v1025 = vshra.s32 %v324, 4
        %v1026 = vshra.s32 %v325, 4
        %v1027 = vshra.s32 %v326, 4
        %v1028 = vshra.s32 %v327, 4
        %v1029 = vand.u32 %v997, 1
        %v1030 = vand.u32 %v998, 1
        %v1031 = vand.u32 %v999, 1
        %v1032 = vand.u32 %v1000, 1
        %v1033 = vand.u32 %v1001, 1
        %v1034 = vand.u32 %v1002, 1
        %v1035 = vand.u32 %v1003, 1
        %v1036 = vand.u32 %v1004, 1
        %v1037 = vand.u32 %v1005, 1
        %v1038 = vand.u32 %v1006, 1
        %v1039 = vand.u32 %v1007, 1
        %v1040 = vand.u32 %v1008, 1
        %v1041 = vand.u32 %v1009, 1
        %v1042 = vand.u32 %v1010, 1
        %v1043 = vand.u32 %v1011, 1
        %v1044 = vand.u32 %v1012, 1
        %v1045 = vand.u32 %v1013, 1
        %v1046 = vand.u32 %v1014, 1
        %v1047 = vand.u32 %v1015, 1
        %v1048 = vand.u32 %v1016, 1
        %v1049 = vand.u32 %v1017, 1
        %v1050 = vand.u32 %v1018, 1
        %v1051 = vand.u32 %v1019, 1
        %v1052 = vand.u32 %v1020, 1
        %v1053 = vand.u32 %v1021, 1
        %v1054 = vand.u32 %v1022, 1
        %v1055 = vand.u32 %v1023, 1
        %v1056 = vand.u32 %v1024, 1
        %v1057 = vand.u32 %v1025, 1
        %v1058 = vand.u32 %v1026, 1
        %v1059 = vand.u32 %v1027, 1
        %v1060 = vand.u32 %v1028, 1
        %v1061 = vcvt.s32.f32 %v1029
        %v1062 = vcvt.s32.f32 %v1030
        %v1063 = vcvt.s32.f32 %v1031
        %v1064 = vcvt.s32.f32 %v1032
        %v1065 = vcvt.s32.f32 %v1033
        %v1066 = vcvt.s32.f32 %v1034
        %v1067 = vcvt.s32.f32 %v1035
        %v1068 = vcvt.s32.f32 %v1036
        %v1069 = vcvt.s32.f32 %v1037
        %v1070 = vcvt.s32.f32 %v1038
        %v1071 = vcvt.s32.f32 %v1039
        %v1072 = vcvt.s32.f32 %v1040
        %v1073 = vcvt.s32.f32 %v1041
        %v1074 = vcvt.s32.f32 %v1042
        %v1075 = vcvt.s32.f32 %v1043
        %v1076 = vcvt.s32.f32 %v1044
        %v1077 = vcvt.s32.f32 %v1045
        %v1078 = vcvt.s32.f32 %v1046
        %v1079 = vcvt.s32.f32 %v1047
        %v1080 = vcvt.s32.f32 %v1048
        %v1081 = vcvt.s32.f32 %v1049
        %v1082 = vcvt.s32.f32 %v1050
        %v1083 = vcvt.s32.f32 %v1051
        %v1084 = vcvt.s32.f32 %v1052
        %v1085 = vcvt.s32.f32 %v1053
        %v1086 = vcvt.s32.f32 %v1054
        %v1087 = vcvt.s32.f32 %v1055
        %v1088 = vcvt.s32.f32 %v1056
        %v1089 = vcvt.s32.f32 %v1057
        %v1090 = vcvt.s32.f32 %v1058
        %v1091 = vcvt.s32.f32 %v1059
        %v1092 = vcvt.s32.f32 %v1060
        %v1093 = vpack.c.bf16 %v1063, %v1061
        %v1094 = vpack.c.bf16 %v1064, %v1062
        %v1095 = vpack.c.bf16 %v1067, %v1065
        %v1096 = vpack.c.bf16 %v1068, %v1066
        %v1097 = vpack.c.bf16 %v1071, %v1069
        %v1098 = vpack.c.bf16 %v1072, %v1070
        %v1099 = vpack.c.bf16 %v1075, %v1073
        %v1100 = vpack.c.bf16 %v1076, %v1074
        %v1101 = vpack.c.bf16 %v1079, %v1077
        %v1102 = vpack.c.bf16 %v1080, %v1078
        %v1103 = vpack.c.bf16 %v1083, %v1081
        %v1104 = vpack.c.bf16 %v1084, %v1082
        %v1105 = vpack.c.bf16 %v1087, %v1085
        %v1106 = vpack.c.bf16 %v1088, %v1086
        %v1107 = vpack.c.bf16 %v1091, %v1089
        %v1108 = vpack.c.bf16 %v1092, %v1090
        %v1109 = vshra.s32 %v296, 5
        %v1110 = vshra.s32 %v297, 5
        %v1111 = vshra.s32 %v298, 5
        %v1112 = vshra.s32 %v299, 5
        %v1113 = vshra.s32 %v300, 5
        %v1114 = vshra.s32 %v301, 5
        %v1115 = vshra.s32 %v302, 5
        %v1116 = vshra.s32 %v303, 5
        %v1117 = vshra.s32 %v304, 5
        %v1118 = vshra.s32 %v305, 5
        %v1119 = vshra.s32 %v306, 5
        %v1120 = vshra.s32 %v307, 5
        %v1121 = vshra.s32 %v308, 5
        %v1122 = vshra.s32 %v309, 5
        %v1123 = vshra.s32 %v310, 5
        %v1124 = vshra.s32 %v311, 5
        %v1125 = vshra.s32 %v312, 5
        %v1126 = vshra.s32 %v313, 5
        %v1127 = vshra.s32 %v314, 5
        %v1128 = vshra.s32 %v315, 5
        %v1129 = vshra.s32 %v316, 5
        %v1130 = vshra.s32 %v317, 5
        %v1131 = vshra.s32 %v318, 5
        %v1132 = vshra.s32 %v319, 5
        %v1133 = vshra.s32 %v320, 5
        %v1134 = vshra.s32 %v321, 5
        %v1135 = vshra.s32 %v322, 5
        %v1136 = vshra.s32 %v323, 5
        %v1137 = vshra.s32 %v324, 5
        %v1138 = vshra.s32 %v325, 5
        %v1139 = vshra.s32 %v326, 5
        %v1140 = vshra.s32 %v327, 5
        %v1141 = vand.u32 %v1109, 1
        %v1142 = vand.u32 %v1110, 1
        %v1143 = vand.u32 %v1111, 1
        %v1144 = vand.u32 %v1112, 1
        %v1145 = vand.u32 %v1113, 1
        %v1146 = vand.u32 %v1114, 1
        %v1147 = vand.u32 %v1115, 1
        %v1148 = vand.u32 %v1116, 1
        %v1149 = vand.u32 %v1117, 1
        %v1150 = vand.u32 %v1118, 1
        %v1151 = vand.u32 %v1119, 1
        %v1152 = vand.u32 %v1120, 1
        %v1153 = vand.u32 %v1121, 1
        %v1154 = vand.u32 %v1122, 1
        %v1155 = vand.u32 %v1123, 1
        %v1156 = vand.u32 %v1124, 1
        %v1157 = vand.u32 %v1125, 1
        %v1158 = vand.u32 %v1126, 1
        %v1159 = vand.u32 %v1127, 1
        %v1160 = vand.u32 %v1128, 1
        %v1161 = vand.u32 %v1129, 1
        %v1162 = vand.u32 %v1130, 1
        %v1163 = vand.u32 %v1131, 1
        %v1164 = vand.u32 %v1132, 1
        %v1165 = vand.u32 %v1133, 1
        %v1166 = vand.u32 %v1134, 1
        %v1167 = vand.u32 %v1135, 1
        %v1168 = vand.u32 %v1136, 1
        %v1169 = vand.u32 %v1137, 1
        %v1170 = vand.u32 %v1138, 1
        %v1171 = vand.u32 %v1139, 1
        %v1172 = vand.u32 %v1140, 1
        %v1173 = vcvt.s32.f32 %v1141
        %v1174 = vcvt.s32.f32 %v1142
        %v1175 = vcvt.s32.f32 %v1143
        %v1176 = vcvt.s32.f32 %v1144
        %v1177 = vcvt.s32.f32 %v1145
        %v1178 = vcvt.s32.f32 %v1146
        %v1179 = vcvt.s32.f32 %v1147
        %v1180 = vcvt.s32.f32 %v1148
        %v1181 = vcvt.s32.f32 %v1149
        %v1182 = vcvt.s32.f32 %v1150
        %v1183 = vcvt.s32.f32 %v1151
        %v1184 = vcvt.s32.f32 %v1152
        %v1185 = vcvt.s32.f32 %v1153
        %v1186 = vcvt.s32.f32 %v1154
        %v1187 = vcvt.s32.f32 %v1155
        %v1188 = vcvt.s32.f32 %v1156
        %v1189 = vcvt.s32.f32 %v1157
        %v1190 = vcvt.s32.f32 %v1158
        %v1191 = vcvt.s32.f32 %v1159
        %v1192 = vcvt.s32.f32 %v1160
        %v1193 = vcvt.s32.f32 %v1161
        %v1194 = vcvt.s32.f32 %v1162
        %v1195 = vcvt.s32.f32 %v1163
        %v1196 = vcvt.s32.f32 %v1164
        %v1197 = vcvt.s32.f32 %v1165
        %v1198 = vcvt.s32.f32 %v1166
        %v1199 = vcvt.s32.f32 %v1167
        %v1200 = vcvt.s32.f32 %v1168
        %v1201 = vcvt.s32.f32 %v1169
        %v1202 = vcvt.s32.f32 %v1170
        %v1203 = vcvt.s32.f32 %v1171
        %v1204 = vcvt.s32.f32 %v1172
        %v1205 = vpack.c.bf16 %v1175, %v1173
        %v1206 = vpack.c.bf16 %v1176, %v1174
        %v1207 = vpack.c.bf16 %v1179, %v1177
        %v1208 = vpack.c.bf16 %v1180, %v1178
        %v1209 = vpack.c.bf16 %v1183, %v1181
        %v1210 = vpack.c.bf16 %v1184, %v1182
        %v1211 = vpack.c.bf16 %v1187, %v1185
        %v1212 = vpack.c.bf16 %v1188, %v1186
        %v1213 = vpack.c.bf16 %v1191, %v1189
        %v1214 = vpack.c.bf16 %v1192, %v1190
        %v1215 = vpack.c.bf16 %v1195, %v1193
        %v1216 = vpack.c.bf16 %v1196, %v1194
        %v1217 = vpack.c.bf16 %v1199, %v1197
        %v1218 = vpack.c.bf16 %v1200, %v1198
        %v1219 = vpack.c.bf16 %v1203, %v1201
        %v1220 = vpack.c.bf16 %v1204, %v1202
        %v1221 = vld [vmem:[#allocation2] sm:$0xff]
        %v1222 = vld [vmem:[#allocation2 + $0x8] sm:$0xff]
        %v1223 = vld [vmem:[#allocation2 + $0x10] sm:$0xff]
        %v1224 = vld [vmem:[#allocation2 + $0x18] sm:$0xff]
        %v1227 = vunpack.c.l.b16 %v995
        %v1228 = vunpack.c.l.b16 %v996
        %v1229 = vpack.c.b16 %v1228, %v1227
        %1231 = vmatprep.subr.bf16.mxu0 %v1094
        %1232 = vmatpush1.bf16.msra.mxu0 %v1093
        %1233 = vmatprep.subr.bf16.mxu0 %v1096
        %1234 = vmatpush1.bf16.msra.mxu0 %v1095
        %1235 = vmatprep.subr.bf16.mxu0 %v1098
        %1236 = vmatpush1.bf16.msra.mxu0 %v1097
        %1237 = vmatprep.subr.bf16.mxu0 %v1100
        %1238 = vmatpush1.bf16.msra.mxu0 %v1099
        %1239 = vmatprep.subr.bf16.mxu0 %v1102
        %1240 = vmatpush1.bf16.msra.mxu0 %v1101
        %1241 = vmatprep.subr.bf16.mxu0 %v1104
        %1242 = vmatpush1.bf16.msra.mxu0 %v1103
        %1243 = vmatprep.subr.bf16.mxu0 %v1106
        %1244 = vmatpush1.bf16.msra.mxu0 %v1105
        %1245 = vmatprep.subr.bf16.mxu0 %v1108
        %1246 = vmatpush1.bf16.msra.mxu0 %v1107
        %1247 = vmatprep.subr.bf16.mxu0 0
        %1248 = vmatpush1.bf16.msra.mxu0 0
        %1249 = vmatprep.subr.bf16.mxu0 0
        %1250 = vmatpush1.bf16.msra.mxu0 0
        %1251 = vmatprep.subr.bf16.mxu0 0
        %1252 = vmatpush1.bf16.msra.mxu0 0
        %1253 = vmatprep.subr.bf16.mxu0 0
        %1254 = vmatpush1.bf16.msra.mxu0 0
        %1255 = vmatprep.subr.bf16.mxu0 0
        %1256 = vmatpush1.bf16.msra.mxu0 0
        %1257 = vmatprep.subr.bf16.mxu0 0
        %1258 = vmatpush1.bf16.msra.mxu0 0
        %1259 = vmatprep.subr.bf16.mxu0 0
        %1260 = vmatpush1.bf16.msra.mxu0 0
        %1261 = vmatprep.subr.bf16.mxu0 0
        %1262 = vmatpush1.bf16.msra.mxu0 0
        %1263 = vmatprep.mubr.bf16.mxu0 0
        %1264 = vmatmul.mubr.bf16.gmra.mrb[0].mxu0 %v1229
        %v1265 = vpop.f32.mrb[0].mxu0
        %v1266 = vadd.f32 0.0, %v1265
        %v1267 = vpop.f32.mrb[0].mxu0
        %v1268 = vadd.f32 0.0, %v1267
        %v1269 = vpop.f32.mrb[0].mxu0
        %v1270 = vadd.f32 0.0, %v1269
        %v1271 = vpop.f32.mrb[0].mxu0
        %v1272 = vadd.f32 0.0, %v1271
        %1273 = vdwg.mxu0
        %v1274 = vadd.f32 %v1221, %v1266
        %v1275 = vadd.f32 %v1222, %v1268
        %v1276 = vadd.f32 %v1223, %v1270
        %v1277 = vadd.f32 %v1224, %v1272
        %1278 = vst [vmem:[#allocation2] sm:$0xff] %v1274
        %1279 = vst [vmem:[#allocation2 + $0x8] sm:$0xff] %v1275
        %1280 = vst [vmem:[#allocation2 + $0x10] sm:$0xff] %v1276
        %1281 = vst [vmem:[#allocation2 + $0x18] sm:$0xff] %v1277
        %v1282 = vld [vmem:[#allocation3] sm:$0xff]
        %v1283 = vld [vmem:[#allocation3 + $0x8] sm:$0xff]
        %v1284 = vld [vmem:[#allocation3 + $0x10] sm:$0xff]
        %v1285 = vld [vmem:[#allocation3 + $0x18] sm:$0xff]
        %1286 = vmatprep.subr.bf16.mxu0 %v1206
        %1287 = vmatpush1.bf16.msra.mxu0 %v1205
        %1288 = vmatprep.subr.bf16.mxu0 %v1208
        %1289 = vmatpush1.bf16.msra.mxu0 %v1207
        %1290 = vmatprep.subr.bf16.mxu0 %v1210
        %1291 = vmatpush1.bf16.msra.mxu0 %v1209
        %1292 = vmatprep.subr.bf16.mxu0 %v1212
        %1293 = vmatpush1.bf16.msra.mxu0 %v1211
        %1294 = vmatprep.subr.bf16.mxu0 %v1214
        %1295 = vmatpush1.bf16.msra.mxu0 %v1213
        %1296 = vmatprep.subr.bf16.mxu0 %v1216
        %1297 = vmatpush1.bf16.msra.mxu0 %v1215
        %1298 = vmatprep.subr.bf16.mxu0 %v1218
        %1299 = vmatpush1.bf16.msra.mxu0 %v1217
        %1300 = vmatprep.subr.bf16.mxu0 %v1220
        %1301 = vmatpush1.bf16.msra.mxu0 %v1219
        %1302 = vmatprep.subr.bf16.mxu0 0
        %1303 = vmatpush1.bf16.msra.mxu0 0
        %1304 = vmatprep.subr.bf16.mxu0 0
        %1305 = vmatpush1.bf16.msra.mxu0 0
        %1306 = vmatprep.subr.bf16.mxu0 0
        %1307 = vmatpush1.bf16.msra.mxu0 0
        %1308 = vmatprep.subr.bf16.mxu0 0
        %1309 = vmatpush1.bf16.msra.mxu0 0
        %1310 = vmatprep.subr.bf16.mxu0 0
        %1311 = vmatpush1.bf16.msra.mxu0 0
        %1312 = vmatprep.subr.bf16.mxu0 0
        %1313 = vmatpush1.bf16.msra.mxu0 0
        %1314 = vmatprep.subr.bf16.mxu0 0
        %1315 = vmatpush1.bf16.msra.mxu0 0
        %1316 = vmatprep.subr.bf16.mxu0 0
        %1317 = vmatpush1.bf16.msra.mxu0 0
        %1318 = vmatprep.mubr.bf16.mxu0 0
        %1319 = vmatmul.mubr.bf16.gmra.mrb[0].mxu0 %v1229
        %v1320 = vpop.f32.mrb[0].mxu0
        %v1321 = vadd.f32 0.0, %v1320
        %v1322 = vpop.f32.mrb[0].mxu0
        %v1323 = vadd.f32 0.0, %v1322
        %v1324 = vpop.f32.mrb[0].mxu0
        %v1325 = vadd.f32 0.0, %v1324
        %v1326 = vpop.f32.mrb[0].mxu0
        %v1327 = vadd.f32 0.0, %v1326
        %1328 = vdwg.mxu0
        %v1329 = vadd.f32 %v1282, %v1321
        %v1330 = vadd.f32 %v1283, %v1323
        %v1331 = vadd.f32 %v1284, %v1325
        %v1332 = vadd.f32 %v1285, %v1327
        %1333 = vst [vmem:[#allocation3] sm:$0xff] %v1329
        %1334 = vst [vmem:[#allocation3 + $0x8] sm:$0xff] %v1330
        %1335 = vst [vmem:[#allocation3 + $0x10] sm:$0xff] %v1331
        %1336 = vst [vmem:[#allocation3 + $0x18] sm:$0xff] %v1332
        %s1337 = sadd.s32 %s328, 384
        %s1338 = sshra.s32 %s1337, 7
        %s1339 = sand.u32 %s1337, 127
        %s1340 = smul.addr %s1338, 4
        %s1341 = scalar_lea.vmem [#allocation4], %s1340
        %v1342 = vld [vmem:[%s1341] sm:$0xf]
        %v1343 = vld [vmem:[%s1341 + $0x10] sm:$0xf]
        %v1344 = vshra.s32 %v296, 6
        %v1345 = vshra.s32 %v297, 6
        %v1346 = vshra.s32 %v298, 6
        %v1347 = vshra.s32 %v299, 6
        %v1348 = vshra.s32 %v300, 6
        %v1349 = vshra.s32 %v301, 6
        %v1350 = vshra.s32 %v302, 6
        %v1351 = vshra.s32 %v303, 6
        %v1352 = vshra.s32 %v304, 6
        %v1353 = vshra.s32 %v305, 6
        %v1354 = vshra.s32 %v306, 6
        %v1355 = vshra.s32 %v307, 6
        %v1356 = vshra.s32 %v308, 6
        %v1357 = vshra.s32 %v309, 6
        %v1358 = vshra.s32 %v310, 6
        %v1359 = vshra.s32 %v311, 6
        %v1360 = vshra.s32 %v312, 6
        %v1361 = vshra.s32 %v313, 6
        %v1362 = vshra.s32 %v314, 6
        %v1363 = vshra.s32 %v315, 6
        %v1364 = vshra.s32 %v316, 6
        %v1365 = vshra.s32 %v317, 6
        %v1366 = vshra.s32 %v318, 6
        %v1367 = vshra.s32 %v319, 6
        %v1368 = vshra.s32 %v320, 6
        %v1369 = vshra.s32 %v321, 6
        %v1370 = vshra.s32 %v322, 6
        %v1371 = vshra.s32 %v323, 6
        %v1372 = vshra.s32 %v324, 6
        %v1373 = vshra.s32 %v325, 6
        %v1374 = vshra.s32 %v326, 6
        %v1375 = vshra.s32 %v327, 6
        %v1376 = vand.u32 %v1344, 1
        %v1377 = vand.u32 %v1345, 1
        %v1378 = vand.u32 %v1346, 1
        %v1379 = vand.u32 %v1347, 1
        %v1380 = vand.u32 %v1348, 1
        %v1381 = vand.u32 %v1349, 1
        %v1382 = vand.u32 %v1350, 1
        %v1383 = vand.u32 %v1351, 1
        %v1384 = vand.u32 %v1352, 1
        %v1385 = vand.u32 %v1353, 1
        %v1386 = vand.u32 %v1354, 1
        %v1387 = vand.u32 %v1355, 1
        %v1388 = vand.u32 %v1356, 1
        %v1389 = vand.u32 %v1357, 1
        %v1390 = vand.u32 %v1358, 1
        %v1391 = vand.u32 %v1359, 1
        %v1392 = vand.u32 %v1360, 1
        %v1393 = vand.u32 %v1361, 1
        %v1394 = vand.u32 %v1362, 1
        %v1395 = vand.u32 %v1363, 1
        %v1396 = vand.u32 %v1364, 1
        %v1397 = vand.u32 %v1365, 1
        %v1398 = vand.u32 %v1366, 1
        %v1399 = vand.u32 %v1367, 1
        %v1400 = vand.u32 %v1368, 1
        %v1401 = vand.u32 %v1369, 1
        %v1402 = vand.u32 %v1370, 1
        %v1403 = vand.u32 %v1371, 1
        %v1404 = vand.u32 %v1372, 1
        %v1405 = vand.u32 %v1373, 1
        %v1406 = vand.u32 %v1374, 1
        %v1407 = vand.u32 %v1375, 1
        %v1408 = vcvt.s32.f32 %v1376
        %v1409 = vcvt.s32.f32 %v1377
        %v1410 = vcvt.s32.f32 %v1378
        %v1411 = vcvt.s32.f32 %v1379
        %v1412 = vcvt.s32.f32 %v1380
        %v1413 = vcvt.s32.f32 %v1381
        %v1414 = vcvt.s32.f32 %v1382
        %v1415 = vcvt.s32.f32 %v1383
        %v1416 = vcvt.s32.f32 %v1384
        %v1417 = vcvt.s32.f32 %v1385
        %v1418 = vcvt.s32.f32 %v1386
        %v1419 = vcvt.s32.f32 %v1387
        %v1420 = vcvt.s32.f32 %v1388
        %v1421 = vcvt.s32.f32 %v1389
        %v1422 = vcvt.s32.f32 %v1390
        %v1423 = vcvt.s32.f32 %v1391
        %v1424 = vcvt.s32.f32 %v1392
        %v1425 = vcvt.s32.f32 %v1393
        %v1426 = vcvt.s32.f32 %v1394
        %v1427 = vcvt.s32.f32 %v1395
        %v1428 = vcvt.s32.f32 %v1396
        %v1429 = vcvt.s32.f32 %v1397
        %v1430 = vcvt.s32.f32 %v1398
        %v1431 = vcvt.s32.f32 %v1399
        %v1432 = vcvt.s32.f32 %v1400
        %v1433 = vcvt.s32.f32 %v1401
        %v1434 = vcvt.s32.f32 %v1402
        %v1435 = vcvt.s32.f32 %v1403
        %v1436 = vcvt.s32.f32 %v1404
        %v1437 = vcvt.s32.f32 %v1405
        %v1438 = vcvt.s32.f32 %v1406
        %v1439 = vcvt.s32.f32 %v1407
        %v1440 = vpack.c.bf16 %v1410, %v1408
        %v1441 = vpack.c.bf16 %v1411, %v1409
        %v1442 = vpack.c.bf16 %v1414, %v1412
        %v1443 = vpack.c.bf16 %v1415, %v1413
        %v1444 = vpack.c.bf16 %v1418, %v1416
        %v1445 = vpack.c.bf16 %v1419, %v1417
        %v1446 = vpack.c.bf16 %v1422, %v1420
        %v1447 = vpack.c.bf16 %v1423, %v1421
        %v1448 = vpack.c.bf16 %v1426, %v1424
        %v1449 = vpack.c.bf16 %v1427, %v1425
        %v1450 = vpack.c.bf16 %v1430, %v1428
        %v1451 = vpack.c.bf16 %v1431, %v1429
        %v1452 = vpack.c.bf16 %v1434, %v1432
        %v1453 = vpack.c.bf16 %v1435, %v1433
        %v1454 = vpack.c.bf16 %v1438, %v1436
        %v1455 = vpack.c.bf16 %v1439, %v1437
        %v1456 = vshra.s32 %v296, 7
        %v1457 = vshra.s32 %v297, 7
        %v1458 = vshra.s32 %v298, 7
        %v1459 = vshra.s32 %v299, 7
        %v1460 = vshra.s32 %v300, 7
        %v1461 = vshra.s32 %v301, 7
        %v1462 = vshra.s32 %v302, 7
        %v1463 = vshra.s32 %v303, 7
        %v1464 = vshra.s32 %v304, 7
        %v1465 = vshra.s32 %v305, 7
        %v1466 = vshra.s32 %v306, 7
        %v1467 = vshra.s32 %v307, 7
        %v1468 = vshra.s32 %v308, 7
        %v1469 = vshra.s32 %v309, 7
        %v1470 = vshra.s32 %v310, 7
        %v1471 = vshra.s32 %v311, 7
        %v1472 = vshra.s32 %v312, 7
        %v1473 = vshra.s32 %v313, 7
        %v1474 = vshra.s32 %v314, 7
        %v1475 = vshra.s32 %v315, 7
        %v1476 = vshra.s32 %v316, 7
        %v1477 = vshra.s32 %v317, 7
        %v1478 = vshra.s32 %v318, 7
        %v1479 = vshra.s32 %v319, 7
        %v1480 = vshra.s32 %v320, 7
        %v1481 = vshra.s32 %v321, 7
        %v1482 = vshra.s32 %v322, 7
        %v1483 = vshra.s32 %v323, 7
        %v1484 = vshra.s32 %v324, 7
        %v1485 = vshra.s32 %v325, 7
        %v1486 = vshra.s32 %v326, 7
        %v1487 = vshra.s32 %v327, 7
        %v1488 = vand.u32 %v1456, 1
        %v1489 = vand.u32 %v1457, 1
        %v1490 = vand.u32 %v1458, 1
        %v1491 = vand.u32 %v1459, 1
        %v1492 = vand.u32 %v1460, 1
        %v1493 = vand.u32 %v1461, 1
        %v1494 = vand.u32 %v1462, 1
        %v1495 = vand.u32 %v1463, 1
        %v1496 = vand.u32 %v1464, 1
        %v1497 = vand.u32 %v1465, 1
        %v1498 = vand.u32 %v1466, 1
        %v1499 = vand.u32 %v1467, 1
        %v1500 = vand.u32 %v1468, 1
        %v1501 = vand.u32 %v1469, 1
        %v1502 = vand.u32 %v1470, 1
        %v1503 = vand.u32 %v1471, 1
        %v1504 = vand.u32 %v1472, 1
        %v1505 = vand.u32 %v1473, 1
        %v1506 = vand.u32 %v1474, 1
        %v1507 = vand.u32 %v1475, 1
        %v1508 = vand.u32 %v1476, 1
        %v1509 = vand.u32 %v1477, 1
        %v1510 = vand.u32 %v1478, 1
        %v1511 = vand.u32 %v1479, 1
        %v1512 = vand.u32 %v1480, 1
        %v1513 = vand.u32 %v1481, 1
        %v1514 = vand.u32 %v1482, 1
        %v1515 = vand.u32 %v1483, 1
        %v1516 = vand.u32 %v1484, 1
        %v1517 = vand.u32 %v1485, 1
        %v1518 = vand.u32 %v1486, 1
        %v1519 = vand.u32 %v1487, 1
        %v1520 = vcvt.s32.f32 %v1488
        %v1521 = vcvt.s32.f32 %v1489
        %v1522 = vcvt.s32.f32 %v1490
        %v1523 = vcvt.s32.f32 %v1491
        %v1524 = vcvt.s32.f32 %v1492
        %v1525 = vcvt.s32.f32 %v1493
        %v1526 = vcvt.s32.f32 %v1494
        %v1527 = vcvt.s32.f32 %v1495
        %v1528 = vcvt.s32.f32 %v1496
        %v1529 = vcvt.s32.f32 %v1497
        %v1530 = vcvt.s32.f32 %v1498
        %v1531 = vcvt.s32.f32 %v1499
        %v1532 = vcvt.s32.f32 %v1500
        %v1533 = vcvt.s32.f32 %v1501
        %v1534 = vcvt.s32.f32 %v1502
        %v1535 = vcvt.s32.f32 %v1503
        %v1536 = vcvt.s32.f32 %v1504
        %v1537 = vcvt.s32.f32 %v1505
        %v1538 = vcvt.s32.f32 %v1506
        %v1539 = vcvt.s32.f32 %v1507
        %v1540 = vcvt.s32.f32 %v1508
        %v1541 = vcvt.s32.f32 %v1509
        %v1542 = vcvt.s32.f32 %v1510
        %v1543 = vcvt.s32.f32 %v1511
        %v1544 = vcvt.s32.f32 %v1512
        %v1545 = vcvt.s32.f32 %v1513
        %v1546 = vcvt.s32.f32 %v1514
        %v1547 = vcvt.s32.f32 %v1515
        %v1548 = vcvt.s32.f32 %v1516
        %v1549 = vcvt.s32.f32 %v1517
        %v1550 = vcvt.s32.f32 %v1518
        %v1551 = vcvt.s32.f32 %v1519
        %v1552 = vpack.c.bf16 %v1522, %v1520
        %v1553 = vpack.c.bf16 %v1523, %v1521
        %v1554 = vpack.c.bf16 %v1526, %v1524
        %v1555 = vpack.c.bf16 %v1527, %v1525
        %v1556 = vpack.c.bf16 %v1530, %v1528
        %v1557 = vpack.c.bf16 %v1531, %v1529
        %v1558 = vpack.c.bf16 %v1534, %v1532
        %v1559 = vpack.c.bf16 %v1535, %v1533
        %v1560 = vpack.c.bf16 %v1538, %v1536
        %v1561 = vpack.c.bf16 %v1539, %v1537
        %v1562 = vpack.c.bf16 %v1542, %v1540
        %v1563 = vpack.c.bf16 %v1543, %v1541
        %v1564 = vpack.c.bf16 %v1546, %v1544
        %v1565 = vpack.c.bf16 %v1547, %v1545
        %v1566 = vpack.c.bf16 %v1550, %v1548
        %v1567 = vpack.c.bf16 %v1551, %v1549
        %v1568 = vld [vmem:[#allocation2] sm:$0xff]
        %v1569 = vld [vmem:[#allocation2 + $0x8] sm:$0xff]
        %v1570 = vld [vmem:[#allocation2 + $0x10] sm:$0xff]
        %v1571 = vld [vmem:[#allocation2 + $0x18] sm:$0xff]
        %v1574 = vunpack.c.l.b16 %v1342
        %v1575 = vunpack.c.l.b16 %v1343
        %v1576 = vpack.c.b16 %v1575, %v1574
        %1578 = vmatprep.subr.bf16.mxu0 %v1441
        %1579 = vmatpush1.bf16.msra.mxu0 %v1440
        %1580 = vmatprep.subr.bf16.mxu0 %v1443
        %1581 = vmatpush1.bf16.msra.mxu0 %v1442
        %1582 = vmatprep.subr.bf16.mxu0 %v1445
        %1583 = vmatpush1.bf16.msra.mxu0 %v1444
        %1584 = vmatprep.subr.bf16.mxu0 %v1447
        %1585 = vmatpush1.bf16.msra.mxu0 %v1446
        %1586 = vmatprep.subr.bf16.mxu0 %v1449
        %1587 = vmatpush1.bf16.msra.mxu0 %v1448
        %1588 = vmatprep.subr.bf16.mxu0 %v1451
        %1589 = vmatpush1.bf16.msra.mxu0 %v1450
        %1590 = vmatprep.subr.bf16.mxu0 %v1453
        %1591 = vmatpush1.bf16.msra.mxu0 %v1452
        %1592 = vmatprep.subr.bf16.mxu0 %v1455
        %1593 = vmatpush1.bf16.msra.mxu0 %v1454
        %1594 = vmatprep.subr.bf16.mxu0 0
        %1595 = vmatpush1.bf16.msra.mxu0 0
        %1596 = vmatprep.subr.bf16.mxu0 0
        %1597 = vmatpush1.bf16.msra.mxu0 0
        %1598 = vmatprep.subr.bf16.mxu0 0
        %1599 = vmatpush1.bf16.msra.mxu0 0
        %1600 = vmatprep.subr.bf16.mxu0 0
        %1601 = vmatpush1.bf16.msra.mxu0 0
        %1602 = vmatprep.subr.bf16.mxu0 0
        %1603 = vmatpush1.bf16.msra.mxu0 0
        %1604 = vmatprep.subr.bf16.mxu0 0
        %1605 = vmatpush1.bf16.msra.mxu0 0
        %1606 = vmatprep.subr.bf16.mxu0 0
        %1607 = vmatpush1.bf16.msra.mxu0 0
        %1608 = vmatprep.subr.bf16.mxu0 0
        %1609 = vmatpush1.bf16.msra.mxu0 0
        %1610 = vmatprep.mubr.bf16.mxu0 0
        %1611 = vmatmul.mubr.bf16.gmra.mrb[0].mxu0 %v1576
        %v1612 = vpop.f32.mrb[0].mxu0
        %v1613 = vadd.f32 0.0, %v1612
        %v1614 = vpop.f32.mrb[0].mxu0
        %v1615 = vadd.f32 0.0, %v1614
        %v1616 = vpop.f32.mrb[0].mxu0
        %v1617 = vadd.f32 0.0, %v1616
        %v1618 = vpop.f32.mrb[0].mxu0
        %v1619 = vadd.f32 0.0, %v1618
        %1620 = vdwg.mxu0
        %v1621 = vadd.f32 %v1568, %v1613
        %v1622 = vadd.f32 %v1569, %v1615
        %v1623 = vadd.f32 %v1570, %v1617
        %v1624 = vadd.f32 %v1571, %v1619
        %1625 = vst [vmem:[#allocation2] sm:$0xff] %v1621
        %1626 = vst [vmem:[#allocation2 + $0x8] sm:$0xff] %v1622
        %1627 = vst [vmem:[#allocation2 + $0x10] sm:$0xff] %v1623
        %1628 = vst [vmem:[#allocation2 + $0x18] sm:$0xff] %v1624
        %v1629 = vld [vmem:[#allocation3] sm:$0xff]
        %v1630 = vld [vmem:[#allocation3 + $0x8] sm:$0xff]
        %v1631 = vld [vmem:[#allocation3 + $0x10] sm:$0xff]
        %v1632 = vld [vmem:[#allocation3 + $0x18] sm:$0xff]
        %1633 = vmatprep.subr.bf16.mxu0 %v1553
        %1634 = vmatpush1.bf16.msra.mxu0 %v1552
        %1635 = vmatprep.subr.bf16.mxu0 %v1555
        %1636 = vmatpush1.bf16.msra.mxu0 %v1554
        %1637 = vmatprep.subr.bf16.mxu0 %v1557
        %1638 = vmatpush1.bf16.msra.mxu0 %v1556
        %1639 = vmatprep.subr.bf16.mxu0 %v1559
        %1640 = vmatpush1.bf16.msra.mxu0 %v1558
        %1641 = vmatprep.subr.bf16.mxu0 %v1561
        %1642 = vmatpush1.bf16.msra.mxu0 %v1560
        %1643 = vmatprep.subr.bf16.mxu0 %v1563
        %1644 = vmatpush1.bf16.msra.mxu0 %v1562
        %1645 = vmatprep.subr.bf16.mxu0 %v1565
        %1646 = vmatpush1.bf16.msra.mxu0 %v1564
        %1647 = vmatprep.subr.bf16.mxu0 %v1567
        %1648 = vmatpush1.bf16.msra.mxu0 %v1566
        %1649 = vmatprep.subr.bf16.mxu0 0
        %1650 = vmatpush1.bf16.msra.mxu0 0
        %1651 = vmatprep.subr.bf16.mxu0 0
        %1652 = vmatpush1.bf16.msra.mxu0 0
        %1653 = vmatprep.subr.bf16.mxu0 0
        %1654 = vmatpush1.bf16.msra.mxu0 0
        %1655 = vmatprep.subr.bf16.mxu0 0
        %1656 = vmatpush1.bf16.msra.mxu0 0
        %1657 = vmatprep.subr.bf16.mxu0 0
        %1658 = vmatpush1.bf16.msra.mxu0 0
        %1659 = vmatprep.subr.bf16.mxu0 0
        %1660 = vmatpush1.bf16.msra.mxu0 0
        %1661 = vmatprep.subr.bf16.mxu0 0
        %1662 = vmatpush1.bf16.msra.mxu0 0
        %1663 = vmatprep.subr.bf16.mxu0 0
        %1664 = vmatpush1.bf16.msra.mxu0 0
        %1665 = vmatprep.mubr.bf16.mxu0 0
        %1666 = vmatmul.mubr.bf16.gmra.mrb[0].mxu0 %v1576
        %v1667 = vpop.f32.mrb[0].mxu0
        %v1668 = vadd.f32 0.0, %v1667
        %v1669 = vpop.f32.mrb[0].mxu0
        %v1670 = vadd.f32 0.0, %v1669
        %v1671 = vpop.f32.mrb[0].mxu0
        %v1672 = vadd.f32 0.0, %v1671
        %v1673 = vpop.f32.mrb[0].mxu0
        %v1674 = vadd.f32 0.0, %v1673
        %1675 = vdwg.mxu0
        %v1676 = vadd.f32 %v1629, %v1668
        %v1677 = vadd.f32 %v1630, %v1670
        %v1678 = vadd.f32 %v1631, %v1672
        %v1679 = vadd.f32 %v1632, %v1674
        %1680 = vst [vmem:[#allocation3] sm:$0xff] %v1676
        %1681 = vst [vmem:[#allocation3 + $0x8] sm:$0xff] %v1677
        %1682 = vst [vmem:[#allocation3 + $0x10] sm:$0xff] %v1678
        %1683 = vst [vmem:[#allocation3 + $0x18] sm:$0xff] %v1679
        // Predicated region
        $region45: #{tpu_custom_call.1} parent=31 // pred_check
          %p1684 = pneg %p244
        $region46: #{tpu_custom_call.1} parent=31 // pred_check_branch
          %1686 = sbr.rel (%p1684) target = $region48
        $region47: #{tpu_custom_call.1} parent=31 // pred_region
          %v1687 = vld [vmem:[%s240] sm:$0x3]
          %v1688 = vunpack.c.l.bf16 %v1687
          %v1689 = vld [vmem:[#allocation2] sm:$0xff]
          %v1690 = vld [vmem:[#allocation2 + $0x8] sm:$0xff]
          %v1691 = vld [vmem:[#allocation2 + $0x10] sm:$0xff]
          %v1692 = vld [vmem:[#allocation2 + $0x18] sm:$0xff]
          %v1694 = vlaneseq
          %v1695 = vshrl.u32 %v1694, 7
          %v1696 = vsub.s32 0, %v1695
          %v1697 = vrot.slane %v1688, %v1696
          %v1698 = vlaneseq
          %v1699 = vshrl.u32 %v1698, 7
          %v1700 = vsub.s32 2, %v1699
          %v1701 = vrot.slane %v1688, %v1700
          %v1704 = vlaneseq
          %v1705 = vshrl.u32 %v1704, 7
          %v1706 = vsub.s32 0, %v1705
          %v1707 = vrot.slane %v1697, %v1706
          %v1708 = vlaneseq
          %v1709 = vshrl.u32 %v1708, 7
          %v1710 = vsub.s32 0, %v1709
          %v1711 = vrot.slane %v1701, %v1710
          %v1712 = vmul.f32 %v1689, %v1707
          %v1713 = vmul.f32 %v1690, %v1711
          %v1714 = vmul.f32 %v1691, %v1707
          %v1715 = vmul.f32 %v1692, %v1711
          %v1716 = vld [vmem:[#allocation3] sm:$0xff]
          %v1717 = vld [vmem:[#allocation3 + $0x8] sm:$0xff]
          %v1718 = vld [vmem:[#allocation3 + $0x10] sm:$0xff]
          %v1719 = vld [vmem:[#allocation3 + $0x18] sm:$0xff]
          %v1720 = vlaneseq
          %v1721 = vshrl.u32 %v1720, 7
          %v1722 = vsub.s32 1, %v1721
          %v1723 = vrot.slane %v1688, %v1722
          %v1724 = vlaneseq
          %v1725 = vshrl.u32 %v1724, 7
          %v1726 = vsub.s32 3, %v1725
          %v1727 = vrot.slane %v1688, %v1726
          %v1730 = vlaneseq
          %v1731 = vshrl.u32 %v1730, 7
          %v1732 = vsub.s32 1, %v1731
          %v1733 = vrot.slane %v1723, %v1732
          %v1734 = vlaneseq
          %v1735 = vshrl.u32 %v1734, 7
          %v1736 = vsub.s32 1, %v1735
          %v1737 = vrot.slane %v1727, %v1736
          %v1738 = vmul.f32 %v1716, %v1733
          %v1739 = vmul.f32 %v1717, %v1737
          %v1740 = vmul.f32 %v1718, %v1733
          %v1741 = vmul.f32 %v1719, %v1737
          %v1742 = vadd.f32 %v1712, %v1738
          %v1743 = vadd.f32 %v1713, %v1739
          %v1744 = vadd.f32 %v1714, %v1740
          %v1745 = vadd.f32 %v1715, %v1741
          %v1746 = vpack.c.bf16 %v1744, %v1742
          %v1747 = vpack.c.bf16 %v1745, %v1743
          %v1750 = vunpack.c.l.b16 %v1746
          %v1751 = vunpack.c.l.b16 %v1747
          %v1752 = vunpack.c.h.b16 %v1746
          %v1753 = vunpack.c.h.b16 %v1747
          %v1754 = vpack.c.b16 %v1751, %v1750
          %v1755 = vpack.c.b16 %v1753, %v1752
          %1758 = vst [vmem:[%s234] sm:$0xff] %v1754
          %1759 = vst [vmem:[%s234 + $0x8] sm:$0xff] %v1755
        $region48: #{tpu_custom_call.1} parent=31 // pred_fallthru
          _
        %s1760 = sand.u32 %s116, 1
        %s1761 = scalar_lea.sflag [#allocation6], %s1760
        %s1762 = sand.u32 %s116, 1
        %s1763 = smul.addr %s1762, 16
        %s1764 = scalar_lea.vmem [#allocation9], %s1763
        // Predicated region
        $region49: #{tpu_custom_call.1} parent=31 // pred_check
          %p1765 = pneg %p126
        $region50: #{tpu_custom_call.1} parent=31 // pred_check_branch
          %1767 = sbr.rel (%p1765) target = $region52
        $region51: #{tpu_custom_call.1} parent=31 // pred_region
          %s1768 = smul.u32 2, %s25
          %s1770 = ssub.s32 256, 256
          %1771 = vsyncadd %s1761, %s1770
          %s1772 = smul.addr %s1768, 64
          %s1773 = scalar_lea.hbm %s3, %s1772
          %s1774 = sshll.u32 %s1764, 4
          %s1775 = int_to_ptr.vmem [resolvable:$true] %s1774
          %1780 = dma.vmem_to_hbm [thread:$0]  %s1775, 256, %s1773, %s1761, 128, 256, 8
        $region52: #{tpu_custom_call.1} parent=31 // pred_fallthru
          _
      $region32: #{tpu_custom_call.1} parent=5 // pred_fallthru
        _
      %p1781 = scmp.le.s32.totalorder 2, %s16
      // Predicated region
      $region53: #{tpu_custom_call.1} parent=5 // pred_check
        %p1782 = pneg %p1781
      $region54: #{tpu_custom_call.1} parent=5 // pred_check_branch
        %1784 = sbr.rel (%p1782) target = $region56
      $region55: #{tpu_custom_call.1} parent=5 // pred_region
        %s1785 = ssub.s32 %s16, 2
        // Predicated region
        $region57: #{tpu_custom_call.1} parent=55 // pred_check
          %p1786 = pneg %p132
        $region58: #{tpu_custom_call.1} parent=55 // pred_check_branch
          %1788 = sbr.rel (%p1786) target = $region60
        $region59: #{tpu_custom_call.1} parent=55 // pred_region
          %s1789 = sand.u32 %s117, 1
          %s1790 = scalar_lea.sflag [#allocation6], %s1789
          %s1791 = sand.u32 %s117, 1
          %s1792 = smul.addr %s1791, 16
          %s1793 = scalar_lea.vmem [#allocation9], %s1792
          %1794 = dma.done %s1790, 256
        $region60: #{tpu_custom_call.1} parent=55 // pred_fallthru
          _
      $region56: #{tpu_custom_call.1} parent=5 // pred_fallthru
        _
    $region6: #{tpu_custom_call.1} parent=1 // loop_footer
      %s20 = sadd.s32 1, %s16
    $region7: #{tpu_custom_call.1} parent=1 // loop_footer_branch
      %15 = sbr.rel target = $region3
    $region8: #{tpu_custom_call.1} parent=1 // loop_exit
      _
    %1795 = vsyncpa [#allocation5], 1
    %s1796 = scalar_lea.sflag [#allocation5], 1
    %1797 = vsyncpa %s1796, 1
    %1798 = vsyncpa [#allocation8], 1
    %s1799 = scalar_lea.sflag [#allocation8], 1
    %1800 = vsyncpa %s1799, 1
    %1801 = vsyncpa [#allocation6], 1
    %s1802 = scalar_lea.sflag [#allocation6], 1
    %1803 = vsyncpa %s1802, 1

</llo_original>
